<compile_context>
chip_gen: v7x
topology: tpu7x:2x2x1
jax: 0.10.0
libtpu: 0.0.40
codegen_flags: <defaults>
</compile_context>

<pallas_src>
import functools

import jax
import jax.numpy as jnp
from jax.experimental import pallas as pl
from jax.experimental.pallas import tpu as pltpu

_VMEM_LIMIT = 48 * 1024 * 1024  # fits v7x (64 MiB physical) and v5e/v6e


def _vmem():
    return pl.BlockSpec(memory_space=pltpu.MemorySpace.VMEM)


def _cparams(sem=None):
    if sem is None:
        return pltpu.CompilerParams(vmem_limit_bytes=_VMEM_LIMIT)
    return pltpu.CompilerParams(dimension_semantics=sem,
                                vmem_limit_bytes=_VMEM_LIMIT)


def _tile(dim, preferred, align):
    """Largest tile <= preferred that divides dim and is a multiple of align,
    else the full dim (full-extent blocks are always legal)."""
    if dim <= preferred:
        return dim
    t = (preferred // align) * align
    while t >= align:
        if dim % t == 0:
            return t
        t -= align
    return dim


# ----------------------------- Pallas kernels -----------------------------

def _linear_kernel(x_ref, w_ref, b_ref, o_ref, acc_ref, *, activation):
    @pl.when(pl.program_id(2) == 0)
    def _():
        acc_ref[...] = jnp.zeros_like(acc_ref)

    acc_ref[...] += jnp.dot(x_ref[...].astype(jnp.bfloat16), w_ref[...],
                            preferred_element_type=jnp.float32)

    @pl.when(pl.program_id(2) == pl.num_programs(2) - 1)
    def _():
        y = acc_ref[...] + b_ref[...]
        if activation == "gelu":
            # TODO(synk): HF BERT uses erf-based GELU; tanh approximation used here.
            y = jax.nn.gelu(y)
        elif activation == "tanh":
            y = jnp.tanh(y)
        o_ref[...] = y.astype(o_ref.dtype)


def linear(x, w, b, activation="none", *, tm=256, tn=512, tk=512):
    """x: (M, K) f32, w: (K, N) bf16, b: (N,) f32 -> (M, N) f32. Tiled matmul."""
    M, K = x.shape
    N = w.shape[1]
    tm = _tile(M, tm, 8)
    tn = _tile(N, tn, 128)
    tk = _tile(K, tk, 128)
    grid = (M // tm, N // tn, K // tk)
    return pl.pallas_call(
        functools.partial(_linear_kernel, activation=activation),
        out_shape=jax.ShapeDtypeStruct((M, N), jnp.float32),
        grid=grid,
        in_specs=[pl.BlockSpec((tm, tk), lambda i, j, k: (i, k)),
                  pl.BlockSpec((tk, tn), lambda i, j, k: (k, j)),
                  pl.BlockSpec((1, tn), lambda i, j, k: (0, j))],
        out_specs=pl.BlockSpec((tm, tn), lambda i, j, k: (i, j)),
        scratch_shapes=[pltpu.VMEM((tm, tn), jnp.float32)],
        compiler_params=_cparams(("parallel", "parallel", "arbitrary")),
    )(x, w, b.reshape(1, N))


def _linear_res_ln_kernel(x_ref, w_ref, b_ref, r_ref, g_ref, bln_ref,
                          o_ref, acc_ref, *, eps):
    @pl.when(pl.program_id(1) == 0)
    def _():
        acc_ref[...] = jnp.zeros_like(acc_ref)

    acc_ref[...] += jnp.dot(x_ref[...].astype(jnp.bfloat16), w_ref[...],
                            preferred_element_type=jnp.float32)

    @pl.when(pl.program_id(1) == pl.num_programs(1) - 1)
    def _():
        y = acc_ref[...] + b_ref[...] + r_ref[...]
        mean = jnp.mean(y, axis=-1, keepdims=True)
        var = jnp.mean((y - mean) ** 2, axis=-1, keepdims=True)
        inv = jax.lax.rsqrt(var + eps)
        o_ref[...] = ((y - mean) * inv * g_ref[...] + bln_ref[...]).astype(o_ref.dtype)


def linear_residual_layernorm(x, w, b, residual, gamma, beta, eps=1e-12,
                              *, tm=256, tk=512):
    """LayerNorm((x @ w + b) + residual).  x: (M, K), w: (K, H) bf16 -> (M, H)."""
    M, K = x.shape
    H = w.shape[1]
    tm = _tile(M, tm, 8)
    tk = _tile(K, tk, 128)
    grid = (M // tm, K // tk)
    return pl.pallas_call(
        functools.partial(_linear_res_ln_kernel, eps=eps),
        out_shape=jax.ShapeDtypeStruct((M, H), jnp.float32),
        grid=grid,
        in_specs=[pl.BlockSpec((tm, tk), lambda i, k: (i, k)),
                  pl.BlockSpec((tk, H), lambda i, k: (k, 0)),
                  pl.BlockSpec((1, H), lambda i, k: (0, 0)),
                  pl.BlockSpec((tm, H), lambda i, k: (i, 0)),
                  pl.BlockSpec((1, H), lambda i, k: (0, 0)),
                  pl.BlockSpec((1, H), lambda i, k: (0, 0))],
        out_specs=pl.BlockSpec((tm, H), lambda i, k: (i, 0)),
        scratch_shapes=[pltpu.VMEM((tm, H), jnp.float32)],
        compiler_params=_cparams(("parallel", "arbitrary")),
    )(x, w, b.reshape(1, H), residual, gamma.reshape(1, H), beta.reshape(1, H))


def _layernorm_kernel(x_ref, g_ref, b_ref, o_ref, *, eps):
    y = x_ref[...]
    mean = jnp.mean(y, axis=-1, keepdims=True)
    var = jnp.mean((y - mean) ** 2, axis=-1, keepdims=True)
    inv = jax.lax.rsqrt(var + eps)
    o_ref[...] = ((y - mean) * inv * g_ref[...] + b_ref[...]).astype(o_ref.dtype)


def layernorm(x, gamma, beta, eps=1e-12, *, tm=256):
    M, H = x.shape
    tm = _tile(M, tm, 8)
    return pl.pallas_call(
        functools.partial(_layernorm_kernel, eps=eps),
        out_shape=jax.ShapeDtypeStruct((M, H), jnp.float32),
        grid=(M // tm,),
        in_specs=[pl.BlockSpec((tm, H), lambda i: (i, 0)),
                  pl.BlockSpec((1, H), lambda i: (0, 0)),
                  pl.BlockSpec((1, H), lambda i: (0, 0))],
        out_specs=pl.BlockSpec((tm, H), lambda i: (i, 0)),
        compiler_params=_cparams(("parallel",)),
    )(x, gamma.reshape(1, H), beta.reshape(1, H))


def _mha_kernel(qkv_ref, m_ref, o_ref, *, nH, Dh):
    """Per-batch multi-head attention; heads split via static lane slices of the
    fused QKV block.  Attention scale is already folded into the Q projection."""
    H = nH * Dh
    qkv = qkv_ref[0]                 # (S, 3H) f32
    mask = m_ref[0]                  # (1, S)  f32 additive (-1e4 at pads)
    ctxs = []
    for h in range(nH):              # static unroll over heads
        q = qkv[:, h * Dh:(h + 1) * Dh].astype(jnp.bfloat16)
        k = qkv[:, H + h * Dh:H + (h + 1) * Dh].astype(jnp.bfloat16)
        v = qkv[:, 2 * H + h * Dh:2 * H + (h + 1) * Dh].astype(jnp.bfloat16)
        s = jax.lax.dot_general(q, k, (((1,), (1,)), ((), ())),
                                preferred_element_type=jnp.float32)   # (S, S)
        s = s + mask
        s = s - jnp.max(s, axis=-1, keepdims=True)
        p = jnp.exp(s)
        p = p * pl.reciprocal(jnp.sum(p, axis=-1, keepdims=True), approx=True)
        ctxs.append(jnp.dot(p.astype(jnp.bfloat16), v,
                            preferred_element_type=jnp.float32))
    # single lane-dense store of the merged heads
    o_ref[0] = jnp.concatenate(ctxs, axis=-1).astype(o_ref.dtype)


def multi_head_attention(qkv, add_mask, *, nH):
    """qkv: (B, S, 3H) f32, add_mask: (B, 1, S) f32 -> context (B, S, H) f32."""
    # TODO(synk): for long sequences, add a kv-block grid axis with online softmax.
    B, S, threeH = qkv.shape
    H = threeH // 3
    Dh = H // nH
    return pl.pallas_call(
        functools.partial(_mha_kernel, nH=nH, Dh=Dh),
        out_shape=jax.ShapeDtypeStruct((B, S, H), jnp.float32),
        grid=(B,),
        in_specs=[pl.BlockSpec((1, S, threeH), lambda b: (b, 0, 0)),
                  pl.BlockSpec((1, 1, S), lambda b: (b, 0, 0))],
        out_specs=pl.BlockSpec((1, S, H), lambda b: (b, 0, 0)),
        compiler_params=_cparams(("parallel",)),
    )(qkv, add_mask)


def _pool_cls_kernel(x_ref, pw_ref, pb_ref, fw_ref, fb_ref, o_ref):
    pooled = jnp.tanh(jnp.dot(x_ref[...].astype(jnp.bfloat16), pw_ref[...],
                              preferred_element_type=jnp.float32) + pb_ref[...])
    # nn.Dropout(p=0.1) between pooler and fc is identity in eval mode.
    logits = jnp.dot(pooled.astype(jnp.bfloat16), fw_ref[...],
                     preferred_element_type=jnp.float32) + fb_ref[...]
    o_ref[...] = logits.astype(o_ref.dtype)


def pooler_classifier(cls_tok, pool_w, pool_b, fc_w, fc_b):
    """Fused pooler(tanh) + classifier; classifier output padded to 128 lanes
    inside the kernel (lane-dense store), sliced back outside."""
    B, H = cls_tok.shape
    C = fc_w.shape[1]
    C_pad = max(128, ((C + 127) // 128) * 128)
    fc_w_p = jnp.zeros((H, C_pad), fc_w.dtype).at[:, :C].set(fc_w)
    fc_b_p = jnp.zeros((C_pad,), jnp.float32).at[:C].set(fc_b)
    logits_pad = pl.pallas_call(
        _pool_cls_kernel,
        out_shape=jax.ShapeDtypeStruct((B, C_pad), jnp.float32),
        in_specs=[_vmem()] * 5,
        out_specs=_vmem(),
        compiler_params=_cparams(),
    )(cls_tok, pool_w, pool_b.reshape(1, H), fc_w_p, fc_b_p.reshape(1, C_pad))
    return logits_pad[:, :C]


# ------------------------------ parameters --------------------------------

def init_params(key, *, vocab, type_vocab, max_pos, H, nH, I, L, num_classes):
    Dh = H // nH
    scale = 1.0 / float(Dh) ** 0.5
    keys = iter(jax.random.split(key, 8 + 8 * L))

    def dense(fan_in, fan_out):
        w = jax.random.normal(next(keys), (fan_in, fan_out), jnp.float32) * 0.02
        b = jnp.zeros((fan_out,), jnp.float32)
        return w, b

    params = {
        "word_emb": jax.random.normal(next(keys), (vocab, H), jnp.float32) * 0.02,
        "pos_emb": jax.random.normal(next(keys), (max_pos, H), jnp.float32) * 0.02,
        "type_emb": jax.random.normal(next(keys), (type_vocab, H), jnp.float32) * 0.02,
        "emb_ln_g": jnp.ones((H,), jnp.float32),
        "emb_ln_b": jnp.zeros((H,), jnp.float32),
        "layers": [],
    }
    for _ in range(L):
        wq, bq = dense(H, H)
        wk, bk = dense(H, H)
        wv, bv = dense(H, H)
        # fused QKV weight (bf16) with the attention scale folded into the Q slice
        wqkv = jnp.concatenate([wq * scale, wk, wv], axis=1).astype(jnp.bfloat16)
        bqkv = jnp.concatenate([bq * scale, bk, bv], axis=0)
        wo, bo = dense(H, H)
        wi, bi = dense(H, I)
        wf, bf = dense(I, H)
        params["layers"].append(dict(
            wqkv=wqkv, bqkv=bqkv,
            wo=wo.astype(jnp.bfloat16), bo=bo,
            wi=wi.astype(jnp.bfloat16), bi=bi,
            wf=wf.astype(jnp.bfloat16), bf=bf,
            ln1_g=jnp.ones((H,), jnp.float32), ln1_b=jnp.zeros((H,), jnp.float32),
            ln2_g=jnp.ones((H,), jnp.float32), ln2_b=jnp.zeros((H,), jnp.float32),
        ))
    pw, pb = dense(H, H)
    fw, fb = dense(H, num_classes)
    params["pool_w"], params["pool_b"] = pw.astype(jnp.bfloat16), pb
    params["fc_w"], params["fc_b"] = fw.astype(jnp.bfloat16), fb
    return params


# ------------------------------ model glue ---------------------------------

def bert_forward(params, input_ids, attention_mask, token_type_ids, *, H, nH, L):
    B, S = input_ids.shape
    M = B * S

    # embeddings (gathers are plain-JAX glue; LayerNorm is a Pallas kernel)
    emb = (jnp.take(params["word_emb"], input_ids, axis=0)
           + params["pos_emb"][None, :S, :]
           + jnp.take(params["type_emb"], token_type_ids, axis=0))
    x = layernorm(emb.reshape(M, H), params["emb_ln_g"], params["emb_ln_b"])

    # additive padding mask, one per batch element: (B, 1, S), f32
    add_mask = ((1.0 - attention_mask.astype(jnp.float32)) * -1e4).reshape(B, 1, S)

    for l in range(L):
        p = params["layers"][l]
        # fused Q|K|V projection: one tiled matmul, lane-dense (M, 3H) output
        qkv = linear(x, p["wqkv"], p["bqkv"])
        # per-batch attention; heads split inside the kernel (no JAX transposes)
        ctx = multi_head_attention(qkv.reshape(B, S, 3 * H), add_mask, nH=nH)
        # fused: output projection + residual + LayerNorm
        x = linear_residual_layernorm(ctx.reshape(M, H), p["wo"], p["bo"], x,
                                      p["ln1_g"], p["ln1_b"])
        # FFN up-projection with fused GELU
        inter = linear(x, p["wi"], p["bi"], activation="gelu")
        # fused: FFN down-projection + residual + LayerNorm
        x = linear_residual_layernorm(inter, p["wf"], p["bf"], x,
                                      p["ln2_g"], p["ln2_b"])

    sequence_out = x.reshape(B, S, H)
    cls_tok = sequence_out[:, 0, :]
    return sequence_out, cls_tok


def custom_model_forward(params, input_ids, attention_mask, token_type_ids,
                         *, H, nH, L):
    # R-Drop repeats every input 2x along the batch.  In eval mode dropout is the
    # identity, so both copies produce bit-identical logits; run the encoder once
    # and duplicate the logits instead of doing 2x redundant compute.
    # TODO(synk): for train-mode R-Drop (stochastic dropout + CE/KL loss via an
    # external loss_fn), run the duplicated batch with independent dropout RNG.
    _, cls_tok = bert_forward(params, input_ids, attention_mask, token_type_ids,
                              H=H, nH=nH, L=L)
    logits = pooler_classifier(cls_tok, params["pool_w"], params["pool_b"],
                               params["fc_w"], params["fc_b"])
    return jnp.concatenate([logits, logits], axis=0)   # shape (2*B, num_classes)


# --------------------------------- main ------------------------------------

if __name__ == "__main__":
    B, S = 2, 8
    H, nH, I, L = 32, 2, 64, 2
    VOCAB, TYPE_VOCAB, MAX_POS, NUM_CLASSES = 64, 2, 16, 2

    key = jax.random.PRNGKey(0)
    k_ids, _ = jax.random.split(key)
    input_ids = jax.random.randint(k_ids, (B, S), 0, VOCAB, dtype=jnp.int32)
    attention_mask = jnp.ones((B, S), dtype=jnp.int32)
    token_type_ids = jnp.zeros((B, S), dtype=jnp.int32)

    params = init_params(jax.random.PRNGKey(42), vocab=VOCAB, type_vocab=TYPE_VOCAB,
                         max_pos=MAX_POS, H=H, nH=nH, I=I, L=L,
                         num_classes=NUM_CLASSES)

    fwd = jax.jit(functools.partial(custom_model_forward, H=H, nH=nH, L=L))
    logits = fwd(params, input_ids, attention_mask, token_type_ids)
    logits = jax.block_until_ready(logits)
    assert logits.shape == (2 * B, NUM_CLASSES)
    print("KERNEL_OK")
</pallas_src>

<mosaic_0001>
module attributes {stable_mosaic.version = 11 : i64} {
  func.func @_mha_kernel(%arg0: i32, %arg1: memref<1x8x96xf32, #tpu.memory_space<vmem>>, %arg2: memref<1x1x8xf32, #tpu.memory_space<vmem>>, %arg3: memref<1x8x32xf32, #tpu.memory_space<vmem>>) attributes {dimension_semantics = [#tpu.dimension_semantics<parallel>], iteration_bounds = array<i64: 2>, scalar_prefetch = 0 : i64, scratch_operands = 0 : i64, tpu.core_type = #tpu.core_type<tc>, window_params = [{transform_indices = @transform_0, window_bounds = array<i64: 1, 8, 96>}, {transform_indices = @transform_1, window_bounds = array<i64: 1, 1, 8>}, {transform_indices = @transform_2, window_bounds = array<i64: 1, 8, 32>}]} {
    %c0 = arith.constant 0 : index
    %c0_0 = arith.constant 0 : index
    %c0_1 = arith.constant 0 : index
    %0 = vector.load %arg1[%c0, %c0_0, %c0_1] : memref<1x8x96xf32, #tpu.memory_space<vmem>>, vector<1x8x96xf32>
    %1 = vector.shape_cast %0 : vector<1x8x96xf32> to vector<8x96xf32>
    %c0_2 = arith.constant 0 : index
    %c0_3 = arith.constant 0 : index
    %c0_4 = arith.constant 0 : index
    %2 = vector.load %arg2[%c0_2, %c0_3, %c0_4] : memref<1x1x8xf32, #tpu.memory_space<vmem>>, vector<1x1x8xf32>
    %3 = vector.shape_cast %2 : vector<1x1x8xf32> to vector<1x8xf32>
    %4 = vector.extract_strided_slice %1 {offsets = [0, 0], sizes = [8, 16], strides = [1, 1]} : vector<8x96xf32> to vector<8x16xf32>
    %5 = arith.truncf %4 : vector<8x16xf32> to vector<8x16xbf16>
    %6 = vector.extract_strided_slice %1 {offsets = [0, 32], sizes = [8, 16], strides = [1, 1]} : vector<8x96xf32> to vector<8x16xf32>
    %7 = arith.truncf %6 : vector<8x16xf32> to vector<8x16xbf16>
    %8 = vector.extract_strided_slice %1 {offsets = [0, 64], sizes = [8, 16], strides = [1, 1]} : vector<8x96xf32> to vector<8x16xf32>
    %9 = arith.truncf %8 : vector<8x16xf32> to vector<8x16xbf16>
    %cst = arith.constant dense<0.000000e+00> : vector<8x8xf32>
    %10 = tpu.matmul %5, %7, %cst {dimension_numbers = #tpu.dot_dimension_numbers<[1], [1], [0], [0], [0, 0, 1, 0], [], []>} : vector<8x16xbf16>, vector<8x16xbf16>, vector<8x8xf32> -> vector<8x8xf32>
    %11 = vector.broadcast %3 : vector<1x8xf32> to vector<8x8xf32>
    %12 = arith.addf %10, %11 : vector<8x8xf32>
    %cst_5 = arith.constant dense<0xFF800000> : vector<8xf32>
    %13 = vector.multi_reduction <maximumf>, %12, %cst_5 [1] : vector<8x8xf32> to vector<8xf32>
    %14 = vector.shape_cast %13 : vector<8xf32> to vector<8x1xf32>
    %15 = vector.broadcast %14 : vector<8x1xf32> to vector<8x8xf32>
    %16 = arith.subf %12, %15 : vector<8x8xf32>
    %17 = math.exp %16 : vector<8x8xf32>
    %cst_6 = arith.constant dense<0.000000e+00> : vector<8xf32>
    %18 = vector.multi_reduction <add>, %17, %cst_6 [1] : vector<8x8xf32> to vector<8xf32>
    %19 = vector.shape_cast %18 : vector<8xf32> to vector<8x1xf32>
    %20 = tpu.reciprocal %19 {approx = true} : vector<8x1xf32> -> vector<8x1xf32>
    %21 = vector.broadcast %20 : vector<8x1xf32> to vector<8x8xf32>
    %22 = arith.mulf %17, %21 : vector<8x8xf32>
    %23 = arith.truncf %22 : vector<8x8xf32> to vector<8x8xbf16>
    %cst_7 = arith.constant dense<0.000000e+00> : vector<8x16xf32>
    %24 = tpu.matmul %23, %9, %cst_7 {dimension_numbers = #tpu.dot_dimension_numbers<[1], [0], [0], [1], [0, 0, 1, 1], [], []>} : vector<8x8xbf16>, vector<8x16xbf16>, vector<8x16xf32> -> vector<8x16xf32>
    %25 = vector.extract_strided_slice %1 {offsets = [0, 16], sizes = [8, 16], strides = [1, 1]} : vector<8x96xf32> to vector<8x16xf32>
    %26 = arith.truncf %25 : vector<8x16xf32> to vector<8x16xbf16>
    %27 = vector.extract_strided_slice %1 {offsets = [0, 48], sizes = [8, 16], strides = [1, 1]} : vector<8x96xf32> to vector<8x16xf32>
    %28 = arith.truncf %27 : vector<8x16xf32> to vector<8x16xbf16>
    %29 = vector.extract_strided_slice %1 {offsets = [0, 80], sizes = [8, 16], strides = [1, 1]} : vector<8x96xf32> to vector<8x16xf32>
    %30 = arith.truncf %29 : vector<8x16xf32> to vector<8x16xbf16>
    %cst_8 = arith.constant dense<0.000000e+00> : vector<8x8xf32>
    %31 = tpu.matmul %26, %28, %cst_8 {dimension_numbers = #tpu.dot_dimension_numbers<[1], [1], [0], [0], [0, 0, 1, 0], [], []>} : vector<8x16xbf16>, vector<8x16xbf16>, vector<8x8xf32> -> vector<8x8xf32>
    %32 = vector.broadcast %3 : vector<1x8xf32> to vector<8x8xf32>
    %33 = arith.addf %31, %32 : vector<8x8xf32>
    %cst_9 = arith.constant dense<0xFF800000> : vector<8xf32>
    %34 = vector.multi_reduction <maximumf>, %33, %cst_9 [1] : vector<8x8xf32> to vector<8xf32>
    %35 = vector.shape_cast %34 : vector<8xf32> to vector<8x1xf32>
    %36 = vector.broadcast %35 : vector<8x1xf32> to vector<8x8xf32>
    %37 = arith.subf %33, %36 : vector<8x8xf32>
    %38 = math.exp %37 : vector<8x8xf32>
    %cst_10 = arith.constant dense<0.000000e+00> : vector<8xf32>
    %39 = vector.multi_reduction <add>, %38, %cst_10 [1] : vector<8x8xf32> to vector<8xf32>
    %40 = vector.shape_cast %39 : vector<8xf32> to vector<8x1xf32>
    %41 = tpu.reciprocal %40 {approx = true} : vector<8x1xf32> -> vector<8x1xf32>
    %42 = vector.broadcast %41 : vector<8x1xf32> to vector<8x8xf32>
    %43 = arith.mulf %38, %42 : vector<8x8xf32>
    %44 = arith.truncf %43 : vector<8x8xf32> to vector<8x8xbf16>
    %cst_11 = arith.constant dense<0.000000e+00> : vector<8x16xf32>
    %45 = tpu.matmul %44, %30, %cst_11 {dimension_numbers = #tpu.dot_dimension_numbers<[1], [0], [0], [1], [0, 0, 1, 1], [], []>} : vector<8x8xbf16>, vector<8x16xbf16>, vector<8x16xf32> -> vector<8x16xf32>
    %46 = tpu.concatenate %24, %45 in 1 : vector<8x16xf32>, vector<8x16xf32> -> vector<8x32xf32>
    %c0_12 = arith.constant 0 : index
    %c0_13 = arith.constant 0 : index
    %c0_14 = arith.constant 0 : index
    %47 = vector.load %arg3[%c0_12, %c0_13, %c0_14] : memref<1x8x32xf32, #tpu.memory_space<vmem>>, vector<1x8x32xf32>
    %48 = vector.shape_cast %47 : vector<1x8x32xf32> to vector<8x32xf32>
    %49 = vector.shape_cast %46 : vector<8x32xf32> to vector<1x8x32xf32>
    tpu.vector_store %arg3[%c0_12, %c0_13, %c0_14], %49 {strides = array<i32>} : memref<1x8x32xf32, #tpu.memory_space<vmem>>, vector<1x8x32xf32>,
    return
  }
  func.func @transform_0(%arg0: i32) -> (i32, i32, i32) {
    %c0_i32 = arith.constant 0 : i32
    %c0_i32_0 = arith.constant 0 : i32
    %c0_i32_1 = arith.constant 0 : i32
    return %arg0, %c0_i32, %c0_i32_0 : i32, i32, i32
  }
  func.func @transform_1(%arg0: i32) -> (i32, i32, i32) {
    %c0_i32 = arith.constant 0 : i32
    %c0_i32_0 = arith.constant 0 : i32
    %c0_i32_1 = arith.constant 0 : i32
    return %arg0, %c0_i32, %c0_i32_0 : i32, i32, i32
  }
  func.func @transform_2(%arg0: i32) -> (i32, i32, i32) {
    %c0_i32 = arith.constant 0 : i32
    %c0_i32_0 = arith.constant 0 : i32
    %c0_i32_1 = arith.constant 0 : i32
    return %arg0, %c0_i32, %c0_i32_0 : i32, i32, i32
  }
}

module attributes {stable_mosaic.version = 11 : i64} {
  func.func @_linear_res_ln_kernel(%arg0: i32, %arg1: i32, %arg2: memref<16x32xf32, #tpu.memory_space<vmem>>, %arg3: memref<32x32xbf16, #tpu.memory_space<vmem>>, %arg4: memref<1x32xf32, #tpu.memory_space<vmem>>, %arg5: memref<16x32xf32, #tpu.memory_space<vmem>>, %arg6: memref<1x32xf32, #tpu.memory_space<vmem>>, %arg7: memref<1x32xf32, #tpu.memory_space<vmem>>, %arg8: memref<16x32xf32, #tpu.memory_space<vmem>>, %arg9: memref<16x32xf32, #tpu.memory_space<vmem>>) attributes {dimension_semantics = [#tpu.dimension_semantics<parallel>, #tpu.dimension_semantics<arbitrary>], iteration_bounds = array<i64: 1, 1>, scalar_prefetch = 0 : i64, scratch_operands = 1 : i64, tpu.core_type = #tpu.core_type<tc>, window_params = [{transform_indices = @transform_0, window_bounds = array<i64: 16, 32>}, {transform_indices = @transform_1, window_bounds = array<i64: 32, 32>}, {pipeline_mode = #tpu.pipeline_mode<synchronous>, transform_indices = @transform_2, window_bounds = array<i64: 1, 32>}, {transform_indices = @transform_3, window_bounds = array<i64: 16, 32>}, {pipeline_mode = #tpu.pipeline_mode<synchronous>, transform_indices = @transform_4, window_bounds = array<i64: 1, 32>}, {pipeline_mode = #tpu.pipeline_mode<synchronous>, transform_indices = @transform_5, window_bounds = array<i64: 1, 32>}, {transform_indices = @transform_6, window_bounds = array<i64: 16, 32>}]} {
    %c0_i32 = arith.constant 0 : i32
    %0 = arith.cmpi eq, %arg1, %c0_i32 : i32
    %1 = arith.extui %0 : i1 to i32
    %c0_i32_0 = arith.constant 0 : i32
    %2 = arith.cmpi ne, %1, %c0_i32_0 : i32
    scf.if %2 {
      %cst_10 = arith.constant 0.000000e+00 : f32
      %13 = vector.broadcast %cst_10 : f32 to vector<16x32xf32>
      %c0_11 = arith.constant 0 : index
      %c0_12 = arith.constant 0 : index
      %14 = vector.load %arg9[%c0_11, %c0_12] : memref<16x32xf32, #tpu.memory_space<vmem>>, vector<16x32xf32>
      tpu.vector_store %arg9[%c0_11, %c0_12], %13 {strides = array<i32>} : memref<16x32xf32, #tpu.memory_space<vmem>>, vector<16x32xf32>,
    } else {
    }
    %c0 = arith.constant 0 : index
    %c0_1 = arith.constant 0 : index
    %3 = vector.load %arg9[%c0, %c0_1] : memref<16x32xf32, #tpu.memory_space<vmem>>, vector<16x32xf32>
    %c0_2 = arith.constant 0 : index
    %c0_3 = arith.constant 0 : index
    %4 = vector.load %arg2[%c0_2, %c0_3] : memref<16x32xf32, #tpu.memory_space<vmem>>, vector<16x32xf32>
    %5 = arith.truncf %4 : vector<16x32xf32> to vector<16x32xbf16>
    %c0_4 = arith.constant 0 : index
    %c0_5 = arith.constant 0 : index
    %6 = vector.load %arg3[%c0_4, %c0_5] : memref<32x32xbf16, #tpu.memory_space<vmem>>, vector<32x32xbf16>
    %cst = arith.constant dense<0.000000e+00> : vector<16x32xf32>
    %7 = tpu.matmul %5, %6, %cst {dimension_numbers = #tpu.dot_dimension_numbers<[1], [0], [0], [1], [0, 0, 1, 1], [], []>} : vector<16x32xbf16>, vector<32x32xbf16>, vector<16x32xf32> -> vector<16x32xf32>
    %8 = arith.addf %3, %7 : vector<16x32xf32>
    %c0_6 = arith.constant 0 : index
    %c0_7 = arith.constant 0 : index
    %9 = vector.load %arg9[%c0_6, %c0_7] : memref<16x32xf32, #tpu.memory_space<vmem>>, vector<16x32xf32>
    tpu.vector_store %arg9[%c0_6, %c0_7], %8 {strides = array<i32>} : memref<16x32xf32, #tpu.memory_space<vmem>>, vector<16x32xf32>,
    %c0_i32_8 = arith.constant 0 : i32
    %10 = arith.cmpi eq, %arg1, %c0_i32_8 : i32
    %11 = arith.extui %10 : i1 to i32
    %c0_i32_9 = arith.constant 0 : i32
    %12 = arith.cmpi ne, %11, %c0_i32_9 : i32
    scf.if %12 {
      %c0_10 = arith.constant 0 : index
      %c0_11 = arith.constant 0 : index
      %13 = vector.load %arg9[%c0_10, %c0_11] : memref<16x32xf32, #tpu.memory_space<vmem>>, vector<16x32xf32>
      %c0_12 = arith.constant 0 : index
      %c0_13 = arith.constant 0 : index
      %14 = vector.load %arg4[%c0_12, %c0_13] : memref<1x32xf32, #tpu.memory_space<vmem>>, vector<1x32xf32>
      %15 = vector.broadcast %14 : vector<1x32xf32> to vector<16x32xf32>
      %16 = arith.addf %13, %15 : vector<16x32xf32>
      %c0_14 = arith.constant 0 : index
      %c0_15 = arith.constant 0 : index
      %17 = vector.load %arg5[%c0_14, %c0_15] : memref<16x32xf32, #tpu.memory_space<vmem>>, vector<16x32xf32>
      %18 = arith.addf %16, %17 : vector<16x32xf32>
      %cst_16 = arith.constant dense<0.000000e+00> : vector<16xf32>
      %19 = vector.multi_reduction <add>, %18, %cst_16 [1] : vector<16x32xf32> to vector<16xf32>
      %20 = vector.shape_cast %19 : vector<16xf32> to vector<16x1xf32>
      %cst_17 = arith.constant 3.200000e+01 : f32
      %21 = vector.broadcast %cst_17 : f32 to vector<16x1xf32>
      %22 = arith.divf %20, %21 : vector<16x1xf32>
      %23 = vector.broadcast %22 : vector<16x1xf32> to vector<16x32xf32>
      %24 = arith.subf %18, %23 : vector<16x32xf32>
      %25 = arith.mulf %24, %24 : vector<16x32xf32>
      %cst_18 = arith.constant dense<0.000000e+00> : vector<16xf32>
      %26 = vector.multi_reduction <add>, %25, %cst_18 [1] : vector<16x32xf32> to vector<16xf32>
      %27 = vector.shape_cast %26 : vector<16xf32> to vector<16x1xf32>
      %cst_19 = arith.constant 3.200000e+01 : f32
      %28 = vector.broadcast %cst_19 : f32 to vector<16x1xf32>
      %29 = arith.divf %27, %28 : vector<16x1xf32>
      %cst_20 = arith.constant 9.99999996E-13 : f32
      %30 = vector.broadcast %cst_20 : f32 to vector<16x1xf32>
      %31 = arith.addf %29, %30 : vector<16x1xf32>
      %32 = math.rsqrt %31 : vector<16x1xf32>
      %33 = vector.broadcast %22 : vector<16x1xf32> to vector<16x32xf32>
      %34 = arith.subf %18, %33 : vector<16x32xf32>
      %35 = vector.broadcast %32 : vector<16x1xf32> to vector<16x32xf32>
      %36 = arith.mulf %34, %35 : vector<16x32xf32>
      %c0_21 = arith.constant 0 : index
      %c0_22 = arith.constant 0 : index
      %37 = vector.load %arg6[%c0_21, %c0_22] : memref<1x32xf32, #tpu.memory_space<vmem>>, vector<1x32xf32>
      %38 = vector.broadcast %37 : vector<1x32xf32> to vector<16x32xf32>
      %39 = arith.mulf %36, %38 : vector<16x32xf32>
      %c0_23 = arith.constant 0 : index
      %c0_24 = arith.constant 0 : index
      %40 = vector.load %arg7[%c0_23, %c0_24] : memref<1x32xf32, #tpu.memory_space<vmem>>, vector<1x32xf32>
      %41 = vector.broadcast %40 : vector<1x32xf32> to vector<16x32xf32>
      %42 = arith.addf %39, %41 : vector<16x32xf32>
      %c0_25 = arith.constant 0 : index
      %c0_26 = arith.constant 0 : index
      %43 = vector.load %arg8[%c0_25, %c0_26] : memref<16x32xf32, #tpu.memory_space<vmem>>, vector<16x32xf32>
      tpu.vector_store %arg8[%c0_25, %c0_26], %42 {strides = array<i32>} : memref<16x32xf32, #tpu.memory_space<vmem>>, vector<16x32xf32>,
    } else {
    }
    return
  }
  func.func @transform_0(%arg0: i32, %arg1: i32) -> (i32, i32) {
    %c0_i32 = arith.constant 0 : i32
    return %arg0, %arg1 : i32, i32
  }
  func.func @transform_1(%arg0: i32, %arg1: i32) -> (i32, i32) {
    %c0_i32 = arith.constant 0 : i32
    %c0_i32_0 = arith.constant 0 : i32
    return %arg1, %c0_i32 : i32, i32
  }
  func.func @transform_2(%arg0: i32, %arg1: i32) -> (i32, i32) {
    %c0_i32 = arith.constant 0 : i32
    %c0_i32_0 = arith.constant 0 : i32
    %c0_i32_1 = arith.constant 0 : i32
    return %c0_i32, %c0_i32_0 : i32, i32
  }
  func.func @transform_3(%arg0: i32, %arg1: i32) -> (i32, i32) {
    %c0_i32 = arith.constant 0 : i32
    %c0_i32_0 = arith.constant 0 : i32
    return %arg0, %c0_i32 : i32, i32
  }
  func.func @transform_4(%arg0: i32, %arg1: i32) -> (i32, i32) {
    %c0_i32 = arith.constant 0 : i32
    %c0_i32_0 = arith.constant 0 : i32
    %c0_i32_1 = arith.constant 0 : i32
    return %c0_i32, %c0_i32_0 : i32, i32
  }
  func.func @transform_5(%arg0: i32, %arg1: i32) -> (i32, i32) {
    %c0_i32 = arith.constant 0 : i32
    %c0_i32_0 = arith.constant 0 : i32
    %c0_i32_1 = arith.constant 0 : i32
    return %c0_i32, %c0_i32_0 : i32, i32
  }
  func.func @transform_6(%arg0: i32, %arg1: i32) -> (i32, i32) {
    %c0_i32 = arith.constant 0 : i32
    %c0_i32_0 = arith.constant 0 : i32
    return %arg0, %c0_i32 : i32, i32
  }
}

module attributes {stable_mosaic.version = 11 : i64} {
  func.func @_linear_kernel(%arg0: i32, %arg1: i32, %arg2: i32, %arg3: memref<16x32xf32, #tpu.memory_space<vmem>>, %arg4: memref<32x96xbf16, #tpu.memory_space<vmem>>, %arg5: memref<1x96xf32, #tpu.memory_space<vmem>>, %arg6: memref<16x96xf32, #tpu.memory_space<vmem>>, %arg7: memref<16x96xf32, #tpu.memory_space<vmem>>) attributes {dimension_semantics = [#tpu.dimension_semantics<parallel>, #tpu.dimension_semantics<parallel>, #tpu.dimension_semantics<arbitrary>], iteration_bounds = array<i64: 1, 1, 1>, scalar_prefetch = 0 : i64, scratch_operands = 1 : i64, tpu.core_type = #tpu.core_type<tc>, window_params = [{transform_indices = @transform_0, window_bounds = array<i64: 16, 32>}, {transform_indices = @transform_1, window_bounds = array<i64: 32, 96>}, {transform_indices = @transform_2, window_bounds = array<i64: 1, 96>}, {transform_indices = @transform_3, window_bounds = array<i64: 16, 96>}]} {
    %c0_i32 = arith.constant 0 : i32
    %0 = arith.cmpi eq, %arg2, %c0_i32 : i32
    %1 = arith.extui %0 : i1 to i32
    %c0_i32_0 = arith.constant 0 : i32
    %2 = arith.cmpi ne, %1, %c0_i32_0 : i32
    scf.if %2 {
      %cst_10 = arith.constant 0.000000e+00 : f32
      %13 = vector.broadcast %cst_10 : f32 to vector<16x96xf32>
      %c0_11 = arith.constant 0 : index
      %c0_12 = arith.constant 0 : index
      %14 = vector.load %arg7[%c0_11, %c0_12] : memref<16x96xf32, #tpu.memory_space<vmem>>, vector<16x96xf32>
      tpu.vector_store %arg7[%c0_11, %c0_12], %13 {strides = array<i32>} : memref<16x96xf32, #tpu.memory_space<vmem>>, vector<16x96xf32>,
    } else {
    }
    %c0 = arith.constant 0 : index
    %c0_1 = arith.constant 0 : index
    %3 = vector.load %arg7[%c0, %c0_1] : memref<16x96xf32, #tpu.memory_space<vmem>>, vector<16x96xf32>
    %c0_2 = arith.constant 0 : index
    %c0_3 = arith.constant 0 : index
    %4 = vector.load %arg3[%c0_2, %c0_3] : memref<16x32xf32, #tpu.memory_space<vmem>>, vector<16x32xf32>
    %5 = arith.truncf %4 : vector<16x32xf32> to vector<16x32xbf16>
    %c0_4 = arith.constant 0 : index
    %c0_5 = arith.constant 0 : index
    %6 = vector.load %arg4[%c0_4, %c0_5] : memref<32x96xbf16, #tpu.memory_space<vmem>>, vector<32x96xbf16>
    %cst = arith.constant dense<0.000000e+00> : vector<16x96xf32>
    %7 = tpu.matmul %5, %6, %cst {dimension_numbers = #tpu.dot_dimension_numbers<[1], [0], [0], [1], [0, 0, 1, 1], [], []>} : vector<16x32xbf16>, vector<32x96xbf16>, vector<16x96xf32> -> vector<16x96xf32>
    %8 = arith.addf %3, %7 : vector<16x96xf32>
    %c0_6 = arith.constant 0 : index
    %c0_7 = arith.constant 0 : index
    %9 = vector.load %arg7[%c0_6, %c0_7] : memref<16x96xf32, #tpu.memory_space<vmem>>, vector<16x96xf32>
    tpu.vector_store %arg7[%c0_6, %c0_7], %8 {strides = array<i32>} : memref<16x96xf32, #tpu.memory_space<vmem>>, vector<16x96xf32>,
    %c0_i32_8 = arith.constant 0 : i32
    %10 = arith.cmpi eq, %arg2, %c0_i32_8 : i32
    %11 = arith.extui %10 : i1 to i32
    %c0_i32_9 = arith.constant 0 : i32
    %12 = arith.cmpi ne, %11, %c0_i32_9 : i32
    scf.if %12 {
      %c0_10 = arith.constant 0 : index
      %c0_11 = arith.constant 0 : index
      %13 = vector.load %arg7[%c0_10, %c0_11] : memref<16x96xf32, #tpu.memory_space<vmem>>, vector<16x96xf32>
      %c0_12 = arith.constant 0 : index
      %c0_13 = arith.constant 0 : index
      %14 = vector.load %arg5[%c0_12, %c0_13] : memref<1x96xf32, #tpu.memory_space<vmem>>, vector<1x96xf32>
      %15 = vector.broadcast %14 : vector<1x96xf32> to vector<16x96xf32>
      %16 = arith.addf %13, %15 : vector<16x96xf32>
      %c0_14 = arith.constant 0 : index
      %c0_15 = arith.constant 0 : index
      %17 = vector.load %arg6[%c0_14, %c0_15] : memref<16x96xf32, #tpu.memory_space<vmem>>, vector<16x96xf32>
      tpu.vector_store %arg6[%c0_14, %c0_15], %16 {strides = array<i32>} : memref<16x96xf32, #tpu.memory_space<vmem>>, vector<16x96xf32>,
    } else {
    }
    return
  }
  func.func @transform_0(%arg0: i32, %arg1: i32, %arg2: i32) -> (i32, i32) {
    %c0_i32 = arith.constant 0 : i32
    return %arg0, %arg2 : i32, i32
  }
  func.func @transform_1(%arg0: i32, %arg1: i32, %arg2: i32) -> (i32, i32) {
    %c0_i32 = arith.constant 0 : i32
    return %arg2, %arg1 : i32, i32
  }
  func.func @transform_2(%arg0: i32, %arg1: i32, %arg2: i32) -> (i32, i32) {
    %c0_i32 = arith.constant 0 : i32
    %c0_i32_0 = arith.constant 0 : i32
    return %c0_i32, %arg1 : i32, i32
  }
  func.func @transform_3(%arg0: i32, %arg1: i32, %arg2: i32) -> (i32, i32) {
    %c0_i32 = arith.constant 0 : i32
    return %arg0, %arg1 : i32, i32
  }
}

module attributes {stable_mosaic.version = 11 : i64} {
  func.func @_layernorm_kernel(%arg0: i32, %arg1: memref<16x32xf32, #tpu.memory_space<vmem>>, %arg2: memref<1x32xf32, #tpu.memory_space<vmem>>, %arg3: memref<1x32xf32, #tpu.memory_space<vmem>>, %arg4: memref<16x32xf32, #tpu.memory_space<vmem>>) attributes {dimension_semantics = [#tpu.dimension_semantics<parallel>], iteration_bounds = array<i64: 1>, scalar_prefetch = 0 : i64, scratch_operands = 0 : i64, tpu.core_type = #tpu.core_type<tc>, window_params = [{transform_indices = @transform_0, window_bounds = array<i64: 16, 32>}, {pipeline_mode = #tpu.pipeline_mode<synchronous>, transform_indices = @transform_1, window_bounds = array<i64: 1, 32>}, {pipeline_mode = #tpu.pipeline_mode<synchronous>, transform_indices = @transform_2, window_bounds = array<i64: 1, 32>}, {transform_indices = @transform_3, window_bounds = array<i64: 16, 32>}]} {
    %c0 = arith.constant 0 : index
    %c0_0 = arith.constant 0 : index
    %0 = vector.load %arg1[%c0, %c0_0] : memref<16x32xf32, #tpu.memory_space<vmem>>, vector<16x32xf32>
    %cst = arith.constant dense<0.000000e+00> : vector<16xf32>
    %1 = vector.multi_reduction <add>, %0, %cst [1] : vector<16x32xf32> to vector<16xf32>
    %2 = vector.shape_cast %1 : vector<16xf32> to vector<16x1xf32>
    %cst_1 = arith.constant 3.200000e+01 : f32
    %3 = vector.broadcast %cst_1 : f32 to vector<16x1xf32>
    %4 = arith.divf %2, %3 : vector<16x1xf32>
    %5 = vector.broadcast %4 : vector<16x1xf32> to vector<16x32xf32>
    %6 = arith.subf %0, %5 : vector<16x32xf32>
    %7 = arith.mulf %6, %6 : vector<16x32xf32>
    %cst_2 = arith.constant dense<0.000000e+00> : vector<16xf32>
    %8 = vector.multi_reduction <add>, %7, %cst_2 [1] : vector<16x32xf32> to vector<16xf32>
    %9 = vector.shape_cast %8 : vector<16xf32> to vector<16x1xf32>
    %cst_3 = arith.constant 3.200000e+01 : f32
    %10 = vector.broadcast %cst_3 : f32 to vector<16x1xf32>
    %11 = arith.divf %9, %10 : vector<16x1xf32>
    %cst_4 = arith.constant 9.99999996E-13 : f32
    %12 = vector.broadcast %cst_4 : f32 to vector<16x1xf32>
    %13 = arith.addf %11, %12 : vector<16x1xf32>
    %14 = math.rsqrt %13 : vector<16x1xf32>
    %15 = vector.broadcast %4 : vector<16x1xf32> to vector<16x32xf32>
    %16 = arith.subf %0, %15 : vector<16x32xf32>
    %17 = vector.broadcast %14 : vector<16x1xf32> to vector<16x32xf32>
    %18 = arith.mulf %16, %17 : vector<16x32xf32>
    %c0_5 = arith.constant 0 : index
    %c0_6 = arith.constant 0 : index
    %19 = vector.load %arg2[%c0_5, %c0_6] : memref<1x32xf32, #tpu.memory_space<vmem>>, vector<1x32xf32>
    %20 = vector.broadcast %19 : vector<1x32xf32> to vector<16x32xf32>
    %21 = arith.mulf %18, %20 : vector<16x32xf32>
    %c0_7 = arith.constant 0 : index
    %c0_8 = arith.constant 0 : index
    %22 = vector.load %arg3[%c0_7, %c0_8] : memref<1x32xf32, #tpu.memory_space<vmem>>, vector<1x32xf32>
    %23 = vector.broadcast %22 : vector<1x32xf32> to vector<16x32xf32>
    %24 = arith.addf %21, %23 : vector<16x32xf32>
    %c0_9 = arith.constant 0 : index
    %c0_10 = arith.constant 0 : index
    %25 = vector.load %arg4[%c0_9, %c0_10] : memref<16x32xf32, #tpu.memory_space<vmem>>, vector<16x32xf32>
    tpu.vector_store %arg4[%c0_9, %c0_10], %24 {strides = array<i32>} : memref<16x32xf32, #tpu.memory_space<vmem>>, vector<16x32xf32>,
    return
  }
  func.func @transform_0(%arg0: i32) -> (i32, i32) {
    %c0_i32 = arith.constant 0 : i32
    %c0_i32_0 = arith.constant 0 : i32
    return %arg0, %c0_i32 : i32, i32
  }
  func.func @transform_1(%arg0: i32) -> (i32, i32) {
    %c0_i32 = arith.constant 0 : i32
    %c0_i32_0 = arith.constant 0 : i32
    %c0_i32_1 = arith.constant 0 : i32
    return %c0_i32, %c0_i32_0 : i32, i32
  }
  func.func @transform_2(%arg0: i32) -> (i32, i32) {
    %c0_i32 = arith.constant 0 : i32
    %c0_i32_0 = arith.constant 0 : i32
    %c0_i32_1 = arith.constant 0 : i32
    return %c0_i32, %c0_i32_0 : i32, i32
  }
  func.func @transform_3(%arg0: i32) -> (i32, i32) {
    %c0_i32 = arith.constant 0 : i32
    %c0_i32_0 = arith.constant 0 : i32
    return %arg0, %c0_i32 : i32, i32
  }
}

module attributes {stable_mosaic.version = 11 : i64} {
  func.func @_linear_res_ln_kernel(%arg0: i32, %arg1: i32, %arg2: memref<16x64xf32, #tpu.memory_space<vmem>>, %arg3: memref<64x32xbf16, #tpu.memory_space<vmem>>, %arg4: memref<1x32xf32, #tpu.memory_space<vmem>>, %arg5: memref<16x32xf32, #tpu.memory_space<vmem>>, %arg6: memref<1x32xf32, #tpu.memory_space<vmem>>, %arg7: memref<1x32xf32, #tpu.memory_space<vmem>>, %arg8: memref<16x32xf32, #tpu.memory_space<vmem>>, %arg9: memref<16x32xf32, #tpu.memory_space<vmem>>) attributes {dimension_semantics = [#tpu.dimension_semantics<parallel>, #tpu.dimension_semantics<arbitrary>], iteration_bounds = array<i64: 1, 1>, scalar_prefetch = 0 : i64, scratch_operands = 1 : i64, tpu.core_type = #tpu.core_type<tc>, window_params = [{transform_indices = @transform_0, window_bounds = array<i64: 16, 64>}, {transform_indices = @transform_1, window_bounds = array<i64: 64, 32>}, {pipeline_mode = #tpu.pipeline_mode<synchronous>, transform_indices = @transform_2, window_bounds = array<i64: 1, 32>}, {transform_indices = @transform_3, window_bounds = array<i64: 16, 32>}, {pipeline_mode = #tpu.pipeline_mode<synchronous>, transform_indices = @transform_4, window_bounds = array<i64: 1, 32>}, {pipeline_mode = #tpu.pipeline_mode<synchronous>, transform_indices = @transform_5, window_bounds = array<i64: 1, 32>}, {transform_indices = @transform_6, window_bounds = array<i64: 16, 32>}]} {
    %c0_i32 = arith.constant 0 : i32
    %0 = arith.cmpi eq, %arg1, %c0_i32 : i32
    %1 = arith.extui %0 : i1 to i32
    %c0_i32_0 = arith.constant 0 : i32
    %2 = arith.cmpi ne, %1, %c0_i32_0 : i32
    scf.if %2 {
      %cst_10 = arith.constant 0.000000e+00 : f32
      %13 = vector.broadcast %cst_10 : f32 to vector<16x32xf32>
      %c0_11 = arith.constant 0 : index
      %c0_12 = arith.constant 0 : index
      %14 = vector.load %arg9[%c0_11, %c0_12] : memref<16x32xf32, #tpu.memory_space<vmem>>, vector<16x32xf32>
      tpu.vector_store %arg9[%c0_11, %c0_12], %13 {strides = array<i32>} : memref<16x32xf32, #tpu.memory_space<vmem>>, vector<16x32xf32>,
    } else {
    }
    %c0 = arith.constant 0 : index
    %c0_1 = arith.constant 0 : index
    %3 = vector.load %arg9[%c0, %c0_1] : memref<16x32xf32, #tpu.memory_space<vmem>>, vector<16x32xf32>
    %c0_2 = arith.constant 0 : index
    %c0_3 = arith.constant 0 : index
    %4 = vector.load %arg2[%c0_2, %c0_3] : memref<16x64xf32, #tpu.memory_space<vmem>>, vector<16x64xf32>
    %5 = arith.truncf %4 : vector<16x64xf32> to vector<16x64xbf16>
    %c0_4 = arith.constant 0 : index
    %c0_5 = arith.constant 0 : index
    %6 = vector.load %arg3[%c0_4, %c0_5] : memref<64x32xbf16, #tpu.memory_space<vmem>>, vector<64x32xbf16>
    %cst = arith.constant dense<0.000000e+00> : vector<16x32xf32>
    %7 = tpu.matmul %5, %6, %cst {dimension_numbers = #tpu.dot_dimension_numbers<[1], [0], [0], [1], [0, 0, 1, 1], [], []>} : vector<16x64xbf16>, vector<64x32xbf16>, vector<16x32xf32> -> vector<16x32xf32>
    %8 = arith.addf %3, %7 : vector<16x32xf32>
    %c0_6 = arith.constant 0 : index
    %c0_7 = arith.constant 0 : index
    %9 = vector.load %arg9[%c0_6, %c0_7] : memref<16x32xf32, #tpu.memory_space<vmem>>, vector<16x32xf32>
    tpu.vector_store %arg9[%c0_6, %c0_7], %8 {strides = array<i32>} : memref<16x32xf32, #tpu.memory_space<vmem>>, vector<16x32xf32>,
    %c0_i32_8 = arith.constant 0 : i32
    %10 = arith.cmpi eq, %arg1, %c0_i32_8 : i32
    %11 = arith.extui %10 : i1 to i32
    %c0_i32_9 = arith.constant 0 : i32
    %12 = arith.cmpi ne, %11, %c0_i32_9 : i32
    scf.if %12 {
      %c0_10 = arith.constant 0 : index
      %c0_11 = arith.constant 0 : index
      %13 = vector.load %arg9[%c0_10, %c0_11] : memref<16x32xf32, #tpu.memory_space<vmem>>, vector<16x32xf32>
      %c0_12 = arith.constant 0 : index
      %c0_13 = arith.constant 0 : index
      %14 = vector.load %arg4[%c0_12, %c0_13] : memref<1x32xf32, #tpu.memory_space<vmem>>, vector<1x32xf32>
      %15 = vector.broadcast %14 : vector<1x32xf32> to vector<16x32xf32>
      %16 = arith.addf %13, %15 : vector<16x32xf32>
      %c0_14 = arith.constant 0 : index
      %c0_15 = arith.constant 0 : index
      %17 = vector.load %arg5[%c0_14, %c0_15] : memref<16x32xf32, #tpu.memory_space<vmem>>, vector<16x32xf32>
      %18 = arith.addf %16, %17 : vector<16x32xf32>
      %cst_16 = arith.constant dense<0.000000e+00> : vector<16xf32>
      %19 = vector.multi_reduction <add>, %18, %cst_16 [1] : vector<16x32xf32> to vector<16xf32>
      %20 = vector.shape_cast %19 : vector<16xf32> to vector<16x1xf32>
      %cst_17 = arith.constant 3.200000e+01 : f32
      %21 = vector.broadcast %cst_17 : f32 to vector<16x1xf32>
      %22 = arith.divf %20, %21 : vector<16x1xf32>
      %23 = vector.broadcast %22 : vector<16x1xf32> to vector<16x32xf32>
      %24 = arith.subf %18, %23 : vector<16x32xf32>
      %25 = arith.mulf %24, %24 : vector<16x32xf32>
      %cst_18 = arith.constant dense<0.000000e+00> : vector<16xf32>
      %26 = vector.multi_reduction <add>, %25, %cst_18 [1] : vector<16x32xf32> to vector<16xf32>
      %27 = vector.shape_cast %26 : vector<16xf32> to vector<16x1xf32>
      %cst_19 = arith.constant 3.200000e+01 : f32
      %28 = vector.broadcast %cst_19 : f32 to vector<16x1xf32>
      %29 = arith.divf %27, %28 : vector<16x1xf32>
      %cst_20 = arith.constant 9.99999996E-13 : f32
      %30 = vector.broadcast %cst_20 : f32 to vector<16x1xf32>
      %31 = arith.addf %29, %30 : vector<16x1xf32>
      %32 = math.rsqrt %31 : vector<16x1xf32>
      %33 = vector.broadcast %22 : vector<16x1xf32> to vector<16x32xf32>
      %34 = arith.subf %18, %33 : vector<16x32xf32>
      %35 = vector.broadcast %32 : vector<16x1xf32> to vector<16x32xf32>
      %36 = arith.mulf %34, %35 : vector<16x32xf32>
      %c0_21 = arith.constant 0 : index
      %c0_22 = arith.constant 0 : index
      %37 = vector.load %arg6[%c0_21, %c0_22] : memref<1x32xf32, #tpu.memory_space<vmem>>, vector<1x32xf32>
      %38 = vector.broadcast %37 : vector<1x32xf32> to vector<16x32xf32>
      %39 = arith.mulf %36, %38 : vector<16x32xf32>
      %c0_23 = arith.constant 0 : index
      %c0_24 = arith.constant 0 : index
      %40 = vector.load %arg7[%c0_23, %c0_24] : memref<1x32xf32, #tpu.memory_space<vmem>>, vector<1x32xf32>
      %41 = vector.broadcast %40 : vector<1x32xf32> to vector<16x32xf32>
      %42 = arith.addf %39, %41 : vector<16x32xf32>
      %c0_25 = arith.constant 0 : index
      %c0_26 = arith.constant 0 : index
      %43 = vector.load %arg8[%c0_25, %c0_26] : memref<16x32xf32, #tpu.memory_space<vmem>>, vector<16x32xf32>
      tpu.vector_store %arg8[%c0_25, %c0_26], %42 {strides = array<i32>} : memref<16x32xf32, #tpu.memory_space<vmem>>, vector<16x32xf32>,
    } else {
    }
    return
  }
  func.func @transform_0(%arg0: i32, %arg1: i32) -> (i32, i32) {
    %c0_i32 = arith.constant 0 : i32
    return %arg0, %arg1 : i32, i32
  }
  func.func @transform_1(%arg0: i32, %arg1: i32) -> (i32, i32) {
    %c0_i32 = arith.constant 0 : i32
    %c0_i32_0 = arith.constant 0 : i32
    return %arg1, %c0_i32 : i32, i32
  }
  func.func @transform_2(%arg0: i32, %arg1: i32) -> (i32, i32) {
    %c0_i32 = arith.constant 0 : i32
    %c0_i32_0 = arith.constant 0 : i32
    %c0_i32_1 = arith.constant 0 : i32
    return %c0_i32, %c0_i32_0 : i32, i32
  }
  func.func @transform_3(%arg0: i32, %arg1: i32) -> (i32, i32) {
    %c0_i32 = arith.constant 0 : i32
    %c0_i32_0 = arith.constant 0 : i32
    return %arg0, %c0_i32 : i32, i32
  }
  func.func @transform_4(%arg0: i32, %arg1: i32) -> (i32, i32) {
    %c0_i32 = arith.constant 0 : i32
    %c0_i32_0 = arith.constant 0 : i32
    %c0_i32_1 = arith.constant 0 : i32
    return %c0_i32, %c0_i32_0 : i32, i32
  }
  func.func @transform_5(%arg0: i32, %arg1: i32) -> (i32, i32) {
    %c0_i32 = arith.constant 0 : i32
    %c0_i32_0 = arith.constant 0 : i32
    %c0_i32_1 = arith.constant 0 : i32
    return %c0_i32, %c0_i32_0 : i32, i32
  }
  func.func @transform_6(%arg0: i32, %arg1: i32) -> (i32, i32) {
    %c0_i32 = arith.constant 0 : i32
    %c0_i32_0 = arith.constant 0 : i32
    return %arg0, %c0_i32 : i32, i32
  }
}

module attributes {stable_mosaic.version = 11 : i64} {
  func.func @_linear_kernel(%arg0: i32, %arg1: i32, %arg2: i32, %arg3: memref<16x32xf32, #tpu.memory_space<vmem>>, %arg4: memref<32x64xbf16, #tpu.memory_space<vmem>>, %arg5: memref<1x64xf32, #tpu.memory_space<vmem>>, %arg6: memref<16x64xf32, #tpu.memory_space<vmem>>, %arg7: memref<16x64xf32, #tpu.memory_space<vmem>>) attributes {dimension_semantics = [#tpu.dimension_semantics<parallel>, #tpu.dimension_semantics<parallel>, #tpu.dimension_semantics<arbitrary>], iteration_bounds = array<i64: 1, 1, 1>, scalar_prefetch = 0 : i64, scratch_operands = 1 : i64, tpu.core_type = #tpu.core_type<tc>, window_params = [{transform_indices = @transform_0, window_bounds = array<i64: 16, 32>}, {transform_indices = @transform_1, window_bounds = array<i64: 32, 64>}, {transform_indices = @transform_2, window_bounds = array<i64: 1, 64>}, {transform_indices = @transform_3, window_bounds = array<i64: 16, 64>}]} {
    %c0_i32 = arith.constant 0 : i32
    %0 = arith.cmpi eq, %arg2, %c0_i32 : i32
    %1 = arith.extui %0 : i1 to i32
    %c0_i32_0 = arith.constant 0 : i32
    %2 = arith.cmpi ne, %1, %c0_i32_0 : i32
    scf.if %2 {
      %cst_10 = arith.constant 0.000000e+00 : f32
      %13 = vector.broadcast %cst_10 : f32 to vector<16x64xf32>
      %c0_11 = arith.constant 0 : index
      %c0_12 = arith.constant 0 : index
      %14 = vector.load %arg7[%c0_11, %c0_12] : memref<16x64xf32, #tpu.memory_space<vmem>>, vector<16x64xf32>
      tpu.vector_store %arg7[%c0_11, %c0_12], %13 {strides = array<i32>} : memref<16x64xf32, #tpu.memory_space<vmem>>, vector<16x64xf32>,
    } else {
    }
    %c0 = arith.constant 0 : index
    %c0_1 = arith.constant 0 : index
    %3 = vector.load %arg7[%c0, %c0_1] : memref<16x64xf32, #tpu.memory_space<vmem>>, vector<16x64xf32>
    %c0_2 = arith.constant 0 : index
    %c0_3 = arith.constant 0 : index
    %4 = vector.load %arg3[%c0_2, %c0_3] : memref<16x32xf32, #tpu.memory_space<vmem>>, vector<16x32xf32>
    %5 = arith.truncf %4 : vector<16x32xf32> to vector<16x32xbf16>
    %c0_4 = arith.constant 0 : index
    %c0_5 = arith.constant 0 : index
    %6 = vector.load %arg4[%c0_4, %c0_5] : memref<32x64xbf16, #tpu.memory_space<vmem>>, vector<32x64xbf16>
    %cst = arith.constant dense<0.000000e+00> : vector<16x64xf32>
    %7 = tpu.matmul %5, %6, %cst {dimension_numbers = #tpu.dot_dimension_numbers<[1], [0], [0], [1], [0, 0, 1, 1], [], []>} : vector<16x32xbf16>, vector<32x64xbf16>, vector<16x64xf32> -> vector<16x64xf32>
    %8 = arith.addf %3, %7 : vector<16x64xf32>
    %c0_6 = arith.constant 0 : index
    %c0_7 = arith.constant 0 : index
    %9 = vector.load %arg7[%c0_6, %c0_7] : memref<16x64xf32, #tpu.memory_space<vmem>>, vector<16x64xf32>
    tpu.vector_store %arg7[%c0_6, %c0_7], %8 {strides = array<i32>} : memref<16x64xf32, #tpu.memory_space<vmem>>, vector<16x64xf32>,
    %c0_i32_8 = arith.constant 0 : i32
    %10 = arith.cmpi eq, %arg2, %c0_i32_8 : i32
    %11 = arith.extui %10 : i1 to i32
    %c0_i32_9 = arith.constant 0 : i32
    %12 = arith.cmpi ne, %11, %c0_i32_9 : i32
    scf.if %12 {
      %c0_10 = arith.constant 0 : index
      %c0_11 = arith.constant 0 : index
      %13 = vector.load %arg7[%c0_10, %c0_11] : memref<16x64xf32, #tpu.memory_space<vmem>>, vector<16x64xf32>
      %c0_12 = arith.constant 0 : index
      %c0_13 = arith.constant 0 : index
      %14 = vector.load %arg5[%c0_12, %c0_13] : memref<1x64xf32, #tpu.memory_space<vmem>>, vector<1x64xf32>
      %15 = vector.broadcast %14 : vector<1x64xf32> to vector<16x64xf32>
      %16 = arith.addf %13, %15 : vector<16x64xf32>
      %17 = arith.mulf %16, %16 : vector<16x64xf32>
      %18 = arith.mulf %16, %17 : vector<16x64xf32>
      %cst_14 = arith.constant 4.471500e-02 : f32
      %19 = vector.broadcast %cst_14 : f32 to vector<16x64xf32>
      %20 = arith.mulf %19, %18 : vector<16x64xf32>
      %21 = arith.addf %16, %20 : vector<16x64xf32>
      %cst_15 = arith.constant 0.797884583 : f32
      %22 = vector.broadcast %cst_15 : f32 to vector<16x64xf32>
      %23 = arith.mulf %22, %21 : vector<16x64xf32>
      %24 = math.tanh %23 : vector<16x64xf32>
      %cst_16 = arith.constant 1.000000e+00 : f32
      %25 = vector.broadcast %cst_16 : f32 to vector<16x64xf32>
      %26 = arith.addf %25, %24 : vector<16x64xf32>
      %cst_17 = arith.constant 5.000000e-01 : f32
      %27 = vector.broadcast %cst_17 : f32 to vector<16x64xf32>
      %28 = arith.mulf %27, %26 : vector<16x64xf32>
      %29 = arith.mulf %16, %28 : vector<16x64xf32>
      %c0_18 = arith.constant 0 : index
      %c0_19 = arith.constant 0 : index
      %30 = vector.load %arg6[%c0_18, %c0_19] : memref<16x64xf32, #tpu.memory_space<vmem>>, vector<16x64xf32>
      tpu.vector_store %arg6[%c0_18, %c0_19], %29 {strides = array<i32>} : memref<16x64xf32, #tpu.memory_space<vmem>>, vector<16x64xf32>,
    } else {
    }
    return
  }
  func.func @transform_0(%arg0: i32, %arg1: i32, %arg2: i32) -> (i32, i32) {
    %c0_i32 = arith.constant 0 : i32
    return %arg0, %arg2 : i32, i32
  }
  func.func @transform_1(%arg0: i32, %arg1: i32, %arg2: i32) -> (i32, i32) {
    %c0_i32 = arith.constant 0 : i32
    return %arg2, %arg1 : i32, i32
  }
  func.func @transform_2(%arg0: i32, %arg1: i32, %arg2: i32) -> (i32, i32) {
    %c0_i32 = arith.constant 0 : i32
    %c0_i32_0 = arith.constant 0 : i32
    return %c0_i32, %arg1 : i32, i32
  }
  func.func @transform_3(%arg0: i32, %arg1: i32, %arg2: i32) -> (i32, i32) {
    %c0_i32 = arith.constant 0 : i32
    return %arg0, %arg1 : i32, i32
  }
}

module attributes {stable_mosaic.version = 11 : i64} {
  func.func @_pool_cls_kernel(%arg0: memref<2x32xf32, #tpu.memory_space<vmem>>, %arg1: memref<32x32xbf16, #tpu.memory_space<vmem>>, %arg2: memref<1x32xf32, #tpu.memory_space<vmem>>, %arg3: memref<32x128xbf16, #tpu.memory_space<vmem>>, %arg4: memref<1x128xf32, #tpu.memory_space<vmem>>, %arg5: memref<2x128xf32, #tpu.memory_space<vmem>>) attributes {dimension_semantics = [], scalar_prefetch = 0 : i64, scratch_operands = 0 : i64, tpu.core_type = #tpu.core_type<tc>} {
    %c0 = arith.constant 0 : index
    %c0_0 = arith.constant 0 : index
    %0 = vector.load %arg0[%c0, %c0_0] : memref<2x32xf32, #tpu.memory_space<vmem>>, vector<2x32xf32>
    %1 = arith.truncf %0 : vector<2x32xf32> to vector<2x32xbf16>
    %c0_1 = arith.constant 0 : index
    %c0_2 = arith.constant 0 : index
    %2 = vector.load %arg1[%c0_1, %c0_2] : memref<32x32xbf16, #tpu.memory_space<vmem>>, vector<32x32xbf16>
    %cst = arith.constant dense<0.000000e+00> : vector<2x32xf32>
    %3 = tpu.matmul %1, %2, %cst {dimension_numbers = #tpu.dot_dimension_numbers<[1], [0], [0], [1], [0, 0, 1, 1], [], []>} : vector<2x32xbf16>, vector<32x32xbf16>, vector<2x32xf32> -> vector<2x32xf32>
    %c0_3 = arith.constant 0 : index
    %c0_4 = arith.constant 0 : index
    %4 = vector.load %arg2[%c0_3, %c0_4] : memref<1x32xf32, #tpu.memory_space<vmem>>, vector<1x32xf32>
    %5 = vector.broadcast %4 : vector<1x32xf32> to vector<2x32xf32>
    %6 = arith.addf %3, %5 : vector<2x32xf32>
    %7 = math.tanh %6 : vector<2x32xf32>
    %8 = arith.truncf %7 : vector<2x32xf32> to vector<2x32xbf16>
    %c0_5 = arith.constant 0 : index
    %c0_6 = arith.constant 0 : index
    %9 = vector.load %arg3[%c0_5, %c0_6] : memref<32x128xbf16, #tpu.memory_space<vmem>>, vector<32x128xbf16>
    %cst_7 = arith.constant dense<0.000000e+00> : vector<2x128xf32>
    %10 = tpu.matmul %8, %9, %cst_7 {dimension_numbers = #tpu.dot_dimension_numbers<[1], [0], [0], [1], [0, 0, 1, 1], [], []>} : vector<2x32xbf16>, vector<32x128xbf16>, vector<2x128xf32> -> vector<2x128xf32>
    %c0_8 = arith.constant 0 : index
    %c0_9 = arith.constant 0 : index
    %11 = vector.load %arg4[%c0_8, %c0_9] : memref<1x128xf32, #tpu.memory_space<vmem>>, vector<1x128xf32>
    %12 = vector.broadcast %11 : vector<1x128xf32> to vector<2x128xf32>
    %13 = arith.addf %10, %12 : vector<2x128xf32>
    %c0_10 = arith.constant 0 : index
    %c0_11 = arith.constant 0 : index
    %14 = vector.load %arg5[%c0_10, %c0_11] : memref<2x128xf32, #tpu.memory_space<vmem>>, vector<2x128xf32>
    tpu.vector_store %arg5[%c0_10, %c0_11], %13 {strides = array<i32>} : memref<2x128xf32, #tpu.memory_space<vmem>>, vector<2x128xf32>,
    return
  }
}

</mosaic_0001>

<llo_original>
// kernel: custom_model_forward.14
$region0: #{custom_model_forward.14}
  #allocation0 [shape = 'u32[]', space=smem, size = 0x4, offset = 0x4, fixed_abs, tag = 'smem constant byte address 0x4 - core index']
  #allocation1 [shape = 'u32[144,128]{1,0:T(1,128)}', space=vmem, size = 0x12000, scoped, tag = 'internal scratch']
  %s0 = inlined_call_operand.vmem [shape: f32[2,8,96], index: 0, kind: input, shape index: {}]
  %s1 = inlined_call_operand.vmem [shape: f32[2,1,8], index: 1, kind: input, shape index: {}]
  %s2 = inlined_call_operand.vmem [shape: f32[2,8,32], index: 2, kind: output, shape index: {}]
  %s3 = sld [smem:[#allocation0]]
  $region41: #{custom_model_forward.14} parent=0
    _
  %s5 = ssub.s32 1, %s3
  %s6 = scalar_select 0, %s5, %s3
  loop: start=0, step=1, limit=4
  $region2: #{custom_model_forward.14} parent=0 // loop_pre_header
    _
  $region3: #{custom_model_forward.14} parent=0 // loop_header
    %s8 = sphi 0, %s12
    %p9 = scmp.ge.s32.totalorder %s8, 4
    %s18 = sphi 0, %s20
    %s21 = sphi 0, %s18
    %s22 = sphi 0, %s21
    %s38 = sphi 0, %s22
    %s44 = sphi 0, %s46
    %s47 = sphi 0, %s44
    %s48 = sphi 0, %s47
    %s64 = sphi 0, %s48
    %s70 = sphi 0, %s72
    %s73 = sphi 0, %s70
    %s74 = sphi 0, %s73
    %s90 = sphi 0, %s74
  $region4: #{custom_model_forward.14} parent=0 // loop_header_branch
    %11 = sbr.rel (%p9) target = $region8
  $region5: #{custom_model_forward.14} parent=0 // loop_body
    %s13 = ssub.s32 %s8, 1
    %s14 = ssub.s32 %s8, 2
    %s15 = sadd.s32 %s8, 1
    %s16 = ssub.s32 %s8, %s15
    %p17 = scmp.eq.s32.totalorder %s16, 0
    %s19 = sadd.s32 %s18, 1
    %s20 = scalar_select %p17, %s18, %s19
    %p23 = pneg %p17
    %p24 = scmp.eq.s32.totalorder %s8, 1
    %p25 = por %p23, %p24
    %p26 = scmp.ne.s32.totalorder %s18, %s21
    %p27 = scmp.eq.s32.totalorder %s8, 0
    %p28 = por %p26, %p27
    %p29 = scmp.ne.s32.totalorder %s18, %s21
    %p30 = scmp.eq.s32.totalorder %s13, 1
    %p31 = por %p29, %p30
    %p32 = scmp.ne.s32.totalorder %s21, %s22
    %p33 = scmp.eq.s32.totalorder %s13, 0
    %p34 = por %p32, %p33
    %p35 = scmp.ne.s32.totalorder %s21, %s22
    %p36 = scmp.eq.s32.totalorder %s14, 1
    %p37 = por %p35, %p36
    %p39 = scmp.ne.s32.totalorder %s22, %s38
    %p40 = scmp.eq.s32.totalorder %s14, 0
    %p41 = por %p39, %p40
    %s42 = ssub.s32 %s8, %s15
    %p43 = scmp.eq.s32.totalorder %s42, 0
    %s45 = sadd.s32 %s44, 1
    %s46 = scalar_select %p43, %s44, %s45
    %p49 = pneg %p43
    %p50 = scmp.eq.s32.totalorder %s8, 1
    %p51 = por %p49, %p50
    %p52 = scmp.ne.s32.totalorder %s44, %s47
    %p53 = scmp.eq.s32.totalorder %s8, 0
    %p54 = por %p52, %p53
    %p55 = scmp.ne.s32.totalorder %s44, %s47
    %p56 = scmp.eq.s32.totalorder %s13, 1
    %p57 = por %p55, %p56
    %p58 = scmp.ne.s32.totalorder %s47, %s48
    %p59 = scmp.eq.s32.totalorder %s13, 0
    %p60 = por %p58, %p59
    %p61 = scmp.ne.s32.totalorder %s47, %s48
    %p62 = scmp.eq.s32.totalorder %s14, 1
    %p63 = por %p61, %p62
    %p65 = scmp.ne.s32.totalorder %s48, %s64
    %p66 = scmp.eq.s32.totalorder %s14, 0
    %p67 = por %p65, %p66
    %s68 = ssub.s32 %s8, %s15
    %p69 = scmp.eq.s32.totalorder %s68, 0
    %s71 = sadd.s32 %s70, 1
    %s72 = scalar_select %p69, %s70, %s71
    %p75 = pneg %p69
    %p76 = scmp.eq.s32.totalorder %s8, 1
    %p77 = por %p75, %p76
    %p78 = scmp.ne.s32.totalorder %s70, %s73
    %p79 = scmp.eq.s32.totalorder %s8, 0
    %p80 = por %p78, %p79
    %p81 = scmp.ne.s32.totalorder %s70, %s73
    %p82 = scmp.eq.s32.totalorder %s13, 1
    %p83 = por %p81, %p82
    %p84 = scmp.ne.s32.totalorder %s73, %s74
    %p85 = scmp.eq.s32.totalorder %s13, 0
    %p86 = por %p84, %p85
    %p87 = scmp.ne.s32.totalorder %s73, %s74
    %p88 = scmp.eq.s32.totalorder %s14, 1
    %p89 = por %p87, %p88
    %p91 = scmp.ne.s32.totalorder %s74, %s90
    %p92 = scmp.eq.s32.totalorder %s14, 0
    %p93 = por %p91, %p92
    %p94 = scmp.le.s32.totalorder 1, %s8
    %p95 = scmp.lt.s32.totalorder %s8, 3
    %p96 = pnand %p94, %p95
    %p97 = pneg %p96
    // Predicated region
    $region9: #{custom_model_forward.14} parent=5 // pred_check
      _
    $region10: #{custom_model_forward.14} parent=5 // pred_check_branch
      %99 = sbr.rel (%p96) target = $region12
    $region11: #{custom_model_forward.14} parent=5 // pred_region
      %s100 = ssub.s32 %s8, 1
    $region12: #{custom_model_forward.14} parent=5 // pred_fallthru
      _
    %p101 = scmp.lt.s32.totalorder %s8, 2
    // Predicated region
    $region13: #{custom_model_forward.14} parent=5 // pred_check
      %p102 = pneg %p101
    $region14: #{custom_model_forward.14} parent=5 // pred_check_branch
      %104 = sbr.rel (%p102) target = $region16
    $region15: #{custom_model_forward.14} parent=5 // pred_region
      // Predicated region
      $region17: #{custom_model_forward.14} parent=15 // pred_check
        %p105 = pneg %p28
      $region18: #{custom_model_forward.14} parent=15 // pred_check_branch
        %107 = sbr.rel (%p105) target = $region20
      $region19: #{custom_model_forward.14} parent=15 // pred_region
        %p108 = scmp.lt.s32.totalorder %s8, 1
        %s109 = scalar_select %p108, %s8, 1
        %s110 = smul.addr %s109, 8
        %s111 = scalar_lea.vmem %s0, %s110
      $region20: #{custom_model_forward.14} parent=15 // pred_fallthru
        _
      // Predicated region
      $region21: #{custom_model_forward.14} parent=15 // pred_check
        %p112 = pneg %p54
      $region22: #{custom_model_forward.14} parent=15 // pred_check_branch
        %114 = sbr.rel (%p112) target = $region24
      $region23: #{custom_model_forward.14} parent=15 // pred_region
        %p115 = scmp.lt.s32.totalorder %s8, 1
        %s116 = scalar_select %p115, %s8, 1
        %s117 = scalar_lea.vmem %s1, %s116
      $region24: #{custom_model_forward.14} parent=15 // pred_fallthru
        _
    $region16: #{custom_model_forward.14} parent=5 // pred_fallthru
      _
    %p118 = scmp.le.s32.totalorder 1, %s8
    %p119 = scmp.lt.s32.totalorder %s8, 3
    %p120 = pnand %p118, %p119
    %p121 = pneg %p120
    // Predicated region
    $region25: #{custom_model_forward.14} parent=5 // pred_check
      _
    $region26: #{custom_model_forward.14} parent=5 // pred_check_branch
      %123 = sbr.rel (%p120) target = $region28
    $region27: #{custom_model_forward.14} parent=5 // pred_region
      %s124 = ssub.s32 %s8, 1
      %p125 = scmp.lt.s32.totalorder %s13, 1
      %s126 = scalar_select %p125, %s13, 1
      %s127 = smul.addr %s126, 8
      %s128 = scalar_lea.vmem %s0, %s127
      %p129 = pneg %p34
      %p130 = pneg %p31
      %p131 = scmp.lt.s32.totalorder %s13, 1
      %s132 = scalar_select %p131, %s13, 1
      %s133 = scalar_lea.vmem %s1, %s132
      %p134 = pneg %p60
      %p135 = pneg %p57
      %p136 = pneg %p86
      %p137 = pneg %p83
      %p138 = scmp.lt.s32.totalorder %s13, 1
      %s139 = scalar_select %p138, %s13, 1
      %s140 = smul.addr %s139, 8
      %s141 = scalar_lea.vmem %s2, %s140
      %p142 = scmp.lt.s32.totalorder %s13, 1
      %s143 = scalar_select %p142, %s13, 1
      %s144 = smul.addr %s143, 8
      %s145 = scalar_lea.vmem %s0, %s144
      %p146 = scmp.lt.s32.totalorder %s13, 1
      %s147 = scalar_select %p146, %s13, 1
      %s148 = scalar_lea.vmem %s1, %s147
      %p149 = scmp.lt.s32.totalorder %s13, 1
      %s150 = scalar_select %p149, %s13, 1
      %s151 = smul.addr %s150, 8
      %s152 = scalar_lea.vmem %s2, %s151
      %v154 = vld [vmem:[%s145] sm:$0xff]
      %v155 = vld [vmem:[%s148] sm:$0x1]
      %v156 = vpack.c.bf16 %v154, %v154
      %v158 = vlaneseq
      %v159 = vshrl.u32 %v158, 7
      %v160 = vsub.s32 0, %v159
      %v161 = vrot.slane %v155, %v160
      %164 = vrot.lane.b32.xlu0 %v156, 96
      %v165 = vpop.permute.xlu0 %164
      %vm166 = vcmask 130048
      %v168 = vsel %vm166, %v156, 0
      %v171 = vsel %vm166, %v165, 0
      %173 = vmatprep.subr.bf16.mxu0 0
      %174 = vmatpush1.bf16.xpose.msra.mxu0 %v171
      %175 = vmatprep.subr.bf16.mxu0 0
      %176 = vmatpush1.bf16.xpose.msra.mxu0 0
      %177 = vmatprep.subr.bf16.mxu0 0
      %178 = vmatpush1.bf16.xpose.msra.mxu0 0
      %179 = vmatprep.subr.bf16.mxu0 0
      %180 = vmatpush1.bf16.xpose.msra.mxu0 0
      %181 = vmatprep.subr.bf16.mxu0 0
      %182 = vmatpush1.bf16.xpose.msra.mxu0 0
      %183 = vmatprep.subr.bf16.mxu0 0
      %184 = vmatpush1.bf16.xpose.msra.mxu0 0
      %185 = vmatprep.subr.bf16.mxu0 0
      %186 = vmatpush1.bf16.xpose.msra.mxu0 0
      %187 = vmatprep.subr.bf16.mxu0 0
      %188 = vmatpush1.bf16.xpose.msra.mxu0 0
      %189 = vmatprep.subr.bf16.mxu0 0
      %190 = vmatpush1.bf16.xpose.msra.mxu0 0
      %191 = vmatprep.subr.bf16.mxu0 0
      %192 = vmatpush1.bf16.xpose.msra.mxu0 0
      %193 = vmatprep.subr.bf16.mxu0 0
      %194 = vmatpush1.bf16.xpose.msra.mxu0 0
      %195 = vmatprep.subr.bf16.mxu0 0
      %196 = vmatpush1.bf16.xpose.msra.mxu0 0
      %197 = vmatprep.subr.bf16.mxu0 0
      %198 = vmatpush1.bf16.xpose.msra.mxu0 0
      %199 = vmatprep.subr.bf16.mxu0 0
      %200 = vmatpush1.bf16.xpose.msra.mxu0 0
      %201 = vmatprep.subr.bf16.mxu0 0
      %202 = vmatpush1.bf16.xpose.msra.mxu0 0
      %203 = vmatprep.subr.bf16.mxu0 0
      %204 = vmatpush1.bf16.xpose.msra.mxu0 0
      %205 = vmatprep.mubr.bf16.mxu0 0
      %206 = vmatmul.mubr.bf16.gmra.mrb[0].mxu0 %v168
      %v207 = vpop.f32.mrb[0].mxu0
      %v208 = vadd.f32 %v161, %v207
      %v209 = vpop.f32.mrb[0].mxu0
      %v210 = vpop.f32.mrb[0].mxu0
      %v211 = vpop.f32.mrb[0].mxu0
      %212 = vdwg.mxu0
      %vm213 = vcmask 64512
      %v214 = vsel %vm213, %v208, -inf
      %215 = vmax.xlane.f32.xlu0 %v214
      %v216 = vpop.xlane.xlu0 %215
      %v217 = vsub.f32 %v208, %v216
      %v218 = vmul.f32 %v217, 1.442695
      %v219 = vpow.pop %v218
      %v220 = vsel %vm213, %v219, 0.0
      %221 = vadd.xlane.f32.xlu0 %v220
      %v222 = vpop.xlane.xlu0 %221
      %v223 = vrcp.pop %v222
      %v224 = vmul.f32 %v219, %v223
      %v225 = vpack.c.bf16 %v224, %v224
      %226 = vrot.lane.b32.xlu0 %v156, 64
      %v227 = vpop.permute.xlu0 %226
      %v229 = vsel %vm213, %v225, 0
      %vm231 = vcmask 1043456
      %v233 = vsel %vm231, %v227, 0
      %235 = vmatprep.subr.bf16.mxu0 0
      %236 = vmatpush1.bf16.msra.mxu0 %v233
      %237 = vmatprep.subr.bf16.mxu0 0
      %238 = vmatpush1.bf16.msra.mxu0 0
      %239 = vmatprep.subr.bf16.mxu0 0
      %240 = vmatpush1.bf16.msra.mxu0 0
      %241 = vmatprep.subr.bf16.mxu0 0
      %242 = vmatpush1.bf16.msra.mxu0 0
      %243 = vmatprep.subr.bf16.mxu0 0
      %244 = vmatpush1.bf16.msra.mxu0 0
      %245 = vmatprep.subr.bf16.mxu0 0
      %246 = vmatpush1.bf16.msra.mxu0 0
      %247 = vmatprep.subr.bf16.mxu0 0
      %248 = vmatpush1.bf16.msra.mxu0 0
      %249 = vmatprep.subr.bf16.mxu0 0
      %250 = vmatpush1.bf16.msra.mxu0 0
      %251 = vmatprep.subr.bf16.mxu0 0
      %252 = vmatpush1.bf16.msra.mxu0 0
      %253 = vmatprep.subr.bf16.mxu0 0
      %254 = vmatpush1.bf16.msra.mxu0 0
      %255 = vmatprep.subr.bf16.mxu0 0
      %256 = vmatpush1.bf16.msra.mxu0 0
      %257 = vmatprep.subr.bf16.mxu0 0
      %258 = vmatpush1.bf16.msra.mxu0 0
      %259 = vmatprep.subr.bf16.mxu0 0
      %260 = vmatpush1.bf16.msra.mxu0 0
      %261 = vmatprep.subr.bf16.mxu0 0
      %262 = vmatpush1.bf16.msra.mxu0 0
      %263 = vmatprep.subr.bf16.mxu0 0
      %264 = vmatpush1.bf16.msra.mxu0 0
      %265 = vmatprep.subr.bf16.mxu0 0
      %266 = vmatpush1.bf16.msra.mxu0 0
      %267 = vmatprep.mubr.bf16.mxu0 0
      %268 = vmatmul.mubr.bf16.gmra.mrb[0].mxu0 %v229
      %v269 = vpop.f32.mrb[0].mxu0
      %v270 = vadd.f32 0.0, %v269
      %v271 = vpop.f32.mrb[0].mxu0
      %v272 = vpop.f32.mrb[0].mxu0
      %v273 = vpop.f32.mrb[0].mxu0
      %274 = vdwg.mxu0
      %275 = vrot.lane.b32.xlu0 %v156, 112
      %v276 = vpop.permute.xlu0 %275
      %277 = vrot.lane.b32.xlu0 %v156, 80
      %v278 = vpop.permute.xlu0 %277
      %v280 = vsel %vm166, %v276, 0
      %v283 = vsel %vm166, %v278, 0
      %285 = vmatprep.subr.bf16.mxu0 0
      %286 = vmatpush1.bf16.xpose.msra.mxu0 %v283
      %287 = vmatprep.subr.bf16.mxu0 0
      %288 = vmatpush1.bf16.xpose.msra.mxu0 0
      %289 = vmatprep.subr.bf16.mxu0 0
      %290 = vmatpush1.bf16.xpose.msra.mxu0 0
      %291 = vmatprep.subr.bf16.mxu0 0
      %292 = vmatpush1.bf16.xpose.msra.mxu0 0
      %293 = vmatprep.subr.bf16.mxu0 0
      %294 = vmatpush1.bf16.xpose.msra.mxu0 0
      %295 = vmatprep.subr.bf16.mxu0 0
      %296 = vmatpush1.bf16.xpose.msra.mxu0 0
      %297 = vmatprep.subr.bf16.mxu0 0
      %298 = vmatpush1.bf16.xpose.msra.mxu0 0
      %299 = vmatprep.subr.bf16.mxu0 0
      %300 = vmatpush1.bf16.xpose.msra.mxu0 0
      %301 = vmatprep.subr.bf16.mxu0 0
      %302 = vmatpush1.bf16.xpose.msra.mxu0 0
      %303 = vmatprep.subr.bf16.mxu0 0
      %304 = vmatpush1.bf16.xpose.msra.mxu0 0
      %305 = vmatprep.subr.bf16.mxu0 0
      %306 = vmatpush1.bf16.xpose.msra.mxu0 0
      %307 = vmatprep.subr.bf16.mxu0 0
      %308 = vmatpush1.bf16.xpose.msra.mxu0 0
      %309 = vmatprep.subr.bf16.mxu0 0
      %310 = vmatpush1.bf16.xpose.msra.mxu0 0
      %311 = vmatprep.subr.bf16.mxu0 0
      %312 = vmatpush1.bf16.xpose.msra.mxu0 0
      %313 = vmatprep.subr.bf16.mxu0 0
      %314 = vmatpush1.bf16.xpose.msra.mxu0 0
      %315 = vmatprep.subr.bf16.mxu0 0
      %316 = vmatpush1.bf16.xpose.msra.mxu0 0
      %317 = vmatprep.mubr.bf16.mxu0 0
      %318 = vmatmul.mubr.bf16.gmra.mrb[0].mxu0 %v280
      %v319 = vpop.f32.mrb[0].mxu0
      %v320 = vadd.f32 %v161, %v319
      %v321 = vpop.f32.mrb[0].mxu0
      %v322 = vpop.f32.mrb[0].mxu0
      %v323 = vpop.f32.mrb[0].mxu0
      %324 = vdwg.mxu0
      %v325 = vsel %vm213, %v320, -inf
      %326 = vmax.xlane.f32.xlu0 %v325
      %v327 = vpop.xlane.xlu0 %326
      %v328 = vsub.f32 %v320, %v327
      %v329 = vmul.f32 %v328, 1.442695
      %v330 = vpow.pop %v329
      %v331 = vsel %vm213, %v330, 0.0
      %332 = vadd.xlane.f32.xlu0 %v331
      %v333 = vpop.xlane.xlu0 %332
      %v334 = vrcp.pop %v333
      %v335 = vmul.f32 %v330, %v334
      %v336 = vpack.c.bf16 %v335, %v335
      %337 = vrot.lane.b32.xlu0 %v156, 48
      %v338 = vpop.permute.xlu0 %337
      %v340 = vsel %vm213, %v336, 0
      %v343 = vsel %vm231, %v338, 0
      %345 = vmatprep.subr.bf16.mxu0 0
      %346 = vmatpush1.bf16.msra.mxu0 %v343
      %347 = vmatprep.subr.bf16.mxu0 0
      %348 = vmatpush1.bf16.msra.mxu0 0
      %349 = vmatprep.subr.bf16.mxu0 0
      %350 = vmatpush1.bf16.msra.mxu0 0
      %351 = vmatprep.subr.bf16.mxu0 0
      %352 = vmatpush1.bf16.msra.mxu0 0
      %353 = vmatprep.subr.bf16.mxu0 0
      %354 = vmatpush1.bf16.msra.mxu0 0
      %355 = vmatprep.subr.bf16.mxu0 0
      %356 = vmatpush1.bf16.msra.mxu0 0
      %357 = vmatprep.subr.bf16.mxu0 0
      %358 = vmatpush1.bf16.msra.mxu0 0
      %359 = vmatprep.subr.bf16.mxu0 0
      %360 = vmatpush1.bf16.msra.mxu0 0
      %361 = vmatprep.subr.bf16.mxu0 0
      %362 = vmatpush1.bf16.msra.mxu0 0
      %363 = vmatprep.subr.bf16.mxu0 0
      %364 = vmatpush1.bf16.msra.mxu0 0
      %365 = vmatprep.subr.bf16.mxu0 0
      %366 = vmatpush1.bf16.msra.mxu0 0
      %367 = vmatprep.subr.bf16.mxu0 0
      %368 = vmatpush1.bf16.msra.mxu0 0
      %369 = vmatprep.subr.bf16.mxu0 0
      %370 = vmatpush1.bf16.msra.mxu0 0
      %371 = vmatprep.subr.bf16.mxu0 0
      %372 = vmatpush1.bf16.msra.mxu0 0
      %373 = vmatprep.subr.bf16.mxu0 0
      %374 = vmatpush1.bf16.msra.mxu0 0
      %375 = vmatprep.subr.bf16.mxu0 0
      %376 = vmatpush1.bf16.msra.mxu0 0
      %377 = vmatprep.mubr.bf16.mxu0 0
      %378 = vmatmul.mubr.bf16.gmra.mrb[0].mxu0 %v340
      %v379 = vpop.f32.mrb[0].mxu0
      %v380 = vadd.f32 0.0, %v379
      %v381 = vpop.f32.mrb[0].mxu0
      %v382 = vpop.f32.mrb[0].mxu0
      %v383 = vpop.f32.mrb[0].mxu0
      %384 = vdwg.mxu0
      %386 = vrot.lane.b32.xlu0 %v380, 16
      %v387 = vpop.permute.xlu0 %386
      %v389 = vsel %vm166, %v270, %v387
      %vm390 = vcmask 261120
      %391 = vst.msk [vmem:[%s152] sm:$0xff] %vm390, %v389
      %p392 = scmp.lt.s32.totalorder %s13, 1
      %s393 = scalar_select %p392, %s13, 1
      %s394 = smul.addr %s393, 8
      %s395 = scalar_lea.vmem %s2, %s394
      // Predicated region
      $region29: #{custom_model_forward.14} parent=27 // pred_check
        %p396 = pneg %p83
      $region30: #{custom_model_forward.14} parent=27 // pred_check_branch
        %398 = sbr.rel (%p396) target = $region32
      $region31: #{custom_model_forward.14} parent=27 // pred_region
        _
      $region32: #{custom_model_forward.14} parent=27 // pred_fallthru
        _
    $region28: #{custom_model_forward.14} parent=5 // pred_fallthru
      _
    %p399 = scmp.le.s32.totalorder 2, %s8
    // Predicated region
    $region33: #{custom_model_forward.14} parent=5 // pred_check
      %p400 = pneg %p399
    $region34: #{custom_model_forward.14} parent=5 // pred_check_branch
      %402 = sbr.rel (%p400) target = $region36
    $region35: #{custom_model_forward.14} parent=5 // pred_region
      %s403 = ssub.s32 %s8, 2
      // Predicated region
      $region37: #{custom_model_forward.14} parent=35 // pred_check
        %p404 = pneg %p89
      $region38: #{custom_model_forward.14} parent=35 // pred_check_branch
        %406 = sbr.rel (%p404) target = $region40
      $region39: #{custom_model_forward.14} parent=35 // pred_region
        %p407 = scmp.lt.s32.totalorder %s14, 1
        %s408 = scalar_select %p407, %s14, 1
        %s409 = smul.addr %s408, 8
        %s410 = scalar_lea.vmem %s2, %s409
      $region40: #{custom_model_forward.14} parent=35 // pred_fallthru
        _
    $region36: #{custom_model_forward.14} parent=5 // pred_fallthru
      _
  $region6: #{custom_model_forward.14} parent=0 // loop_footer
    %s12 = sadd.s32 1, %s8
  $region7: #{custom_model_forward.14} parent=0 // loop_footer_branch
    %7 = sbr.rel target = $region3
  $region8: #{custom_model_forward.14} parent=0 // loop_exit
    _

// kernel: custom_model_forward.15
$region0: #{custom_model_forward.15}
  #allocation0 [shape = 'u32[]', space=smem, size = 0x4, offset = 0x4, fixed_abs, tag = 'smem constant byte address 0x4 - core index']
  #allocation1 [shape = 'u32[144,128]{1,0:T(1,128)}', space=vmem, size = 0x12000, scoped, tag = 'internal scratch']
  #allocation2 [shape = 'f32[16,32]{1,0:T(8,128)}', space=vmem, size = 0x2000, scoped, tag = 'scratch operand']
  %s0 = inlined_call_operand.vmem [shape: f32[16,32], index: 0, kind: input, shape index: {}]
  %s1 = inlined_call_operand.vmem [shape: bf16[32,32], index: 1, kind: input, shape index: {}]
  %s2 = inlined_call_operand.vmem [shape: f32[1,32], index: 2, kind: input, shape index: {}]
  %s3 = inlined_call_operand.vmem [shape: f32[16,32], index: 3, kind: input, shape index: {}]
  %s4 = inlined_call_operand.vmem [shape: f32[1,32], index: 4, kind: input, shape index: {}]
  %s5 = inlined_call_operand.vmem [shape: f32[1,32], index: 5, kind: input, shape index: {}]
  %s6 = inlined_call_operand.vmem [shape: f32[16,32], index: 6, kind: output, shape index: {}]
  %s7 = sld [smem:[#allocation0]]
  $region42: #{custom_model_forward.15} parent=0
    _
  %s9 = ssub.s32 1, %s7
  %s10 = scalar_select 0, %s9, %s7
  // Predicated region
  $region2: #{custom_model_forward.15} parent=0 // pred_check
    _
  $region3: #{custom_model_forward.15} parent=0 // pred_check_branch
    %12 = sbr.rel (0) target = $region5
  $region4: #{custom_model_forward.15} parent=0 // pred_region
    _
  $region5: #{custom_model_forward.15} parent=0 // pred_fallthru
    _
  // Predicated region
  $region6: #{custom_model_forward.15} parent=0 // pred_check
    _
  $region7: #{custom_model_forward.15} parent=0 // pred_check_branch
    %14 = sbr.rel (0) target = $region9
  $region8: #{custom_model_forward.15} parent=0 // pred_region
    _
  $region9: #{custom_model_forward.15} parent=0 // pred_fallthru
    _
  // Predicated region
  $region10: #{custom_model_forward.15} parent=0 // pred_check
    _
  $region11: #{custom_model_forward.15} parent=0 // pred_check_branch
    %16 = sbr.rel (0) target = $region13
  $region12: #{custom_model_forward.15} parent=0 // pred_region
    _
  $region13: #{custom_model_forward.15} parent=0 // pred_fallthru
    _
  // Predicated region
  $region14: #{custom_model_forward.15} parent=0 // pred_check
    _
  $region15: #{custom_model_forward.15} parent=0 // pred_check_branch
    %18 = sbr.rel (0) target = $region17
  $region16: #{custom_model_forward.15} parent=0 // pred_region
    _
  $region17: #{custom_model_forward.15} parent=0 // pred_fallthru
    _
  // Predicated region
  $region18: #{custom_model_forward.15} parent=0 // pred_check
    _
  $region19: #{custom_model_forward.15} parent=0 // pred_check_branch
    %20 = sbr.rel (0) target = $region21
  $region20: #{custom_model_forward.15} parent=0 // pred_region
    _
  $region21: #{custom_model_forward.15} parent=0 // pred_fallthru
    _
  // Predicated region
  $region22: #{custom_model_forward.15} parent=0 // pred_check
    _
  $region23: #{custom_model_forward.15} parent=0 // pred_check_branch
    %22 = sbr.rel (0) target = $region25
  $region24: #{custom_model_forward.15} parent=0 // pred_region
    _
  $region25: #{custom_model_forward.15} parent=0 // pred_fallthru
    _
  %p24 = scmp.eq.s32.totalorder 0, 0
  // Predicated region
  $region26: #{custom_model_forward.15} parent=0 // pred_check
    %p25 = pneg %p24
  $region27: #{custom_model_forward.15} parent=0 // pred_check_branch
    %27 = sbr.rel (%p25) target = $region29
  $region28: #{custom_model_forward.15} parent=0 // pred_region
    %vm28 = vcmask 261120
    %29 = vst.msk [vmem:[#allocation2] sm:$0xff] %vm28, 0.0
    %30 = vst.msk [vmem:[#allocation2 + $0x8] sm:$0xff] %vm28, 0.0
  $region29: #{custom_model_forward.15} parent=0 // pred_fallthru
    _
  %v31 = vld [vmem:[#allocation2] sm:$0xff]
  %v32 = vld [vmem:[#allocation2 + $0x8] sm:$0xff]
  %v33 = vld [vmem:[%s0] sm:$0xff]
  %v34 = vld [vmem:[%s0 + $0x8] sm:$0xff]
  %v35 = vpack.c.bf16 %v34, %v33
  %v36 = vld [vmem:[%s1] sm:$0xf]
  %v37 = vld [vmem:[%s1 + $0x4] sm:$0xf]
  %v38 = vld [vmem:[%s1 + $0x8] sm:$0xf]
  %v39 = vld [vmem:[%s1 + $0xc] sm:$0xf]
  %v44 = vunpack.c.l.b16 %v36
  %v45 = vunpack.c.l.b16 %v37
  %v46 = vunpack.c.l.b16 %v38
  %v47 = vunpack.c.l.b16 %v39
  %v48 = vpack.c.b16 %v45, %v44
  %v49 = vpack.c.b16 %v47, %v46
  %vm52 = vcmask 261120
  %v54 = vsel %vm52, %v35, 0
  %56 = vmatprep.subr.bf16.mxu0 0
  %57 = vmatpush1.bf16.msra.mxu0 %v48
  %58 = vmatprep.subr.bf16.mxu0 0
  %59 = vmatpush1.bf16.msra.mxu0 %v49
  %60 = vmatprep.subr.bf16.mxu0 0
  %61 = vmatpush1.bf16.msra.mxu0 0
  %62 = vmatprep.subr.bf16.mxu0 0
  %63 = vmatpush1.bf16.msra.mxu0 0
  %64 = vmatprep.subr.bf16.mxu0 0
  %65 = vmatpush1.bf16.msra.mxu0 0
  %66 = vmatprep.subr.bf16.mxu0 0
  %67 = vmatpush1.bf16.msra.mxu0 0
  %68 = vmatprep.subr.bf16.mxu0 0
  %69 = vmatpush1.bf16.msra.mxu0 0
  %70 = vmatprep.subr.bf16.mxu0 0
  %71 = vmatpush1.bf16.msra.mxu0 0
  %72 = vmatprep.subr.bf16.mxu0 0
  %73 = vmatpush1.bf16.msra.mxu0 0
  %74 = vmatprep.subr.bf16.mxu0 0
  %75 = vmatpush1.bf16.msra.mxu0 0
  %76 = vmatprep.subr.bf16.mxu0 0
  %77 = vmatpush1.bf16.msra.mxu0 0
  %78 = vmatprep.subr.bf16.mxu0 0
  %79 = vmatpush1.bf16.msra.mxu0 0
  %80 = vmatprep.subr.bf16.mxu0 0
  %81 = vmatpush1.bf16.msra.mxu0 0
  %82 = vmatprep.subr.bf16.mxu0 0
  %83 = vmatpush1.bf16.msra.mxu0 0
  %84 = vmatprep.subr.bf16.mxu0 0
  %85 = vmatpush1.bf16.msra.mxu0 0
  %86 = vmatprep.subr.bf16.mxu0 0
  %87 = vmatpush1.bf16.msra.mxu0 0
  %88 = vmatprep.mubr.bf16.mxu0 0
  %89 = vmatmul.mubr.bf16.gmra.mrb[0].mxu0 %v54
  %v90 = vpop.f32.mrb[0].mxu0
  %v91 = vadd.f32 0.0, %v90
  %v92 = vpop.f32.mrb[0].mxu0
  %v93 = vpop.f32.mrb[0].mxu0
  %v94 = vadd.f32 0.0, %v93
  %v95 = vpop.f32.mrb[0].mxu0
  %96 = vdwg.mxu0
  %v97 = vadd.f32 %v31, %v91
  %v98 = vadd.f32 %v32, %v94
  %99 = vst.msk [vmem:[#allocation2] sm:$0xff] %vm52, %v97
  %100 = vst.msk [vmem:[#allocation2 + $0x8] sm:$0xff] %vm52, %v98
  // Predicated region
  $region30: #{custom_model_forward.15} parent=0 // pred_check
    %p101 = pneg %p24
  $region31: #{custom_model_forward.15} parent=0 // pred_check_branch
    %103 = sbr.rel (%p101) target = $region33
  $region32: #{custom_model_forward.15} parent=0 // pred_region
    %v104 = vld [vmem:[#allocation2] sm:$0xff]
    %v105 = vld [vmem:[#allocation2 + $0x8] sm:$0xff]
    %v106 = vld [vmem:[%s2] sm:$0x1]
    %v108 = vlaneseq
    %v109 = vshrl.u32 %v108, 7
    %v110 = vsub.s32 0, %v109
    %v111 = vrot.slane %v106, %v110
    %v113 = vadd.f32 %v104, %v111
    %v114 = vadd.f32 %v105, %v111
    %v115 = vld [vmem:[%s3] sm:$0xff]
    %v116 = vld [vmem:[%s3 + $0x8] sm:$0xff]
    %v117 = vadd.f32 %v113, %v115
    %v118 = vadd.f32 %v114, %v116
    %v119 = vsel %vm52, %v117, 0.0
    %120 = vadd.xlane.f32.xlu0 %v119
    %v121 = vpop.xlane.xlu0 %120
    %v122 = vsel %vm52, %v118, 0.0
    %123 = vadd.xlane.f32.xlu0 %v122
    %v124 = vpop.xlane.xlu0 %123
    %v125 = vrcp.pop 32.0
    %v126 = vmul.f32 %v121, %v125
    %v127 = vmul.f32 %v124, %v125
    %v128 = vsub.f32 %v117, %v126
    %v129 = vsub.f32 %v118, %v127
    %v130 = vmul.f32 %v128, %v128
    %v131 = vmul.f32 %v129, %v129
    %v132 = vsel %vm52, %v130, 0.0
    %133 = vadd.xlane.f32.xlu0 %v132
    %v134 = vpop.xlane.xlu0 %133
    %v135 = vsel %vm52, %v131, 0.0
    %136 = vadd.xlane.f32.xlu0 %v135
    %v137 = vpop.xlane.xlu0 %136
    %v138 = vmul.f32 %v134, %v125
    %v139 = vmul.f32 %v137, %v125
    %v140 = vadd.f32 %v138, 1e-12
    %v141 = vadd.f32 %v139, 1e-12
    %v142 = vrsqrt.pop %v140
    %v143 = vrsqrt.pop %v141
    %v144 = vmul.f32 %v128, %v142
    %v145 = vmul.f32 %v129, %v143
    %v146 = vld [vmem:[%s4] sm:$0x1]
    %v148 = vlaneseq
    %v149 = vshrl.u32 %v148, 7
    %v150 = vsub.s32 0, %v149
    %v151 = vrot.slane %v146, %v150
    %v153 = vmul.f32 %v144, %v151
    %v154 = vmul.f32 %v145, %v151
    %v155 = vld [vmem:[%s5] sm:$0x1]
    %v157 = vlaneseq
    %v158 = vshrl.u32 %v157, 7
    %v159 = vsub.s32 0, %v158
    %v160 = vrot.slane %v155, %v159
    %v162 = vadd.f32 %v153, %v160
    %v163 = vadd.f32 %v154, %v160
    %164 = vst.msk [vmem:[%s6] sm:$0xff] %vm52, %v162
    %165 = vst.msk [vmem:[%s6 + $0x8] sm:$0xff] %vm52, %v163
  $region33: #{custom_model_forward.15} parent=0 // pred_fallthru
    _
  // Predicated region
  $region34: #{custom_model_forward.15} parent=0 // pred_check
    _
  $region35: #{custom_model_forward.15} parent=0 // pred_check_branch
    %167 = sbr.rel (0) target = $region37
  $region36: #{custom_model_forward.15} parent=0 // pred_region
    _
  $region37: #{custom_model_forward.15} parent=0 // pred_fallthru
    _
  // Predicated region
  $region38: #{custom_model_forward.15} parent=0 // pred_check
    _
  $region39: #{custom_model_forward.15} parent=0 // pred_check_branch
    %169 = sbr.rel (0) target = $region41
  $region40: #{custom_model_forward.15} parent=0 // pred_region
    _
  $region41: #{custom_model_forward.15} parent=0 // pred_fallthru
    _

// kernel: custom_model_forward.13
$region0: #{custom_model_forward.13}
  #allocation0 [shape = 'u32[]', space=smem, size = 0x4, offset = 0x4, fixed_abs, tag = 'smem constant byte address 0x4 - core index']
  #allocation1 [shape = 'u32[144,128]{1,0:T(1,128)}', space=vmem, size = 0x12000, scoped, tag = 'internal scratch']
  #allocation2 [shape = 'f32[16,96]{1,0:T(8,128)}', space=vmem, size = 0x2000, scoped, tag = 'scratch operand']
  %s0 = inlined_call_operand.vmem [shape: f32[16,32], index: 0, kind: input, shape index: {}]
  %s1 = inlined_call_operand.vmem [shape: bf16[32,96], index: 1, kind: input, shape index: {}]
  %s2 = inlined_call_operand.vmem [shape: f32[1,96], index: 2, kind: input, shape index: {}]
  %s3 = inlined_call_operand.vmem [shape: f32[16,96], index: 3, kind: output, shape index: {}]
  %s4 = sld [smem:[#allocation0]]
  $region30: #{custom_model_forward.13} parent=0
    _
  %s6 = ssub.s32 1, %s4
  %s7 = scalar_select 0, %s6, %s4
  // Predicated region
  $region2: #{custom_model_forward.13} parent=0 // pred_check
    _
  $region3: #{custom_model_forward.13} parent=0 // pred_check_branch
    %9 = sbr.rel (0) target = $region5
  $region4: #{custom_model_forward.13} parent=0 // pred_region
    _
  $region5: #{custom_model_forward.13} parent=0 // pred_fallthru
    _
  // Predicated region
  $region6: #{custom_model_forward.13} parent=0 // pred_check
    _
  $region7: #{custom_model_forward.13} parent=0 // pred_check_branch
    %11 = sbr.rel (0) target = $region9
  $region8: #{custom_model_forward.13} parent=0 // pred_region
    _
  $region9: #{custom_model_forward.13} parent=0 // pred_fallthru
    _
  // Predicated region
  $region10: #{custom_model_forward.13} parent=0 // pred_check
    _
  $region11: #{custom_model_forward.13} parent=0 // pred_check_branch
    %13 = sbr.rel (0) target = $region13
  $region12: #{custom_model_forward.13} parent=0 // pred_region
    _
  $region13: #{custom_model_forward.13} parent=0 // pred_fallthru
    _
  %p15 = scmp.eq.s32.totalorder 0, 0
  // Predicated region
  $region14: #{custom_model_forward.13} parent=0 // pred_check
    %p16 = pneg %p15
  $region15: #{custom_model_forward.13} parent=0 // pred_check_branch
    %18 = sbr.rel (%p16) target = $region17
  $region16: #{custom_model_forward.13} parent=0 // pred_region
    %vm19 = vcmask 785408
    %20 = vst.msk [vmem:[#allocation2] sm:$0xff] %vm19, 0.0
    %21 = vst.msk [vmem:[#allocation2 + $0x8] sm:$0xff] %vm19, 0.0
  $region17: #{custom_model_forward.13} parent=0 // pred_fallthru
    _
  %v22 = vld [vmem:[#allocation2] sm:$0xff]
  %v23 = vld [vmem:[#allocation2 + $0x8] sm:$0xff]
  %v24 = vld [vmem:[%s0] sm:$0xff]
  %v25 = vld [vmem:[%s0 + $0x8] sm:$0xff]
  %v26 = vpack.c.bf16 %v25, %v24
  %v27 = vld [vmem:[%s1] sm:$0xf]
  %v28 = vld [vmem:[%s1 + $0x4] sm:$0xf]
  %v29 = vld [vmem:[%s1 + $0x8] sm:$0xf]
  %v30 = vld [vmem:[%s1 + $0xc] sm:$0xf]
  %v35 = vunpack.c.l.b16 %v27
  %v36 = vunpack.c.l.b16 %v28
  %v37 = vunpack.c.l.b16 %v29
  %v38 = vunpack.c.l.b16 %v30
  %v39 = vpack.c.b16 %v36, %v35
  %v40 = vpack.c.b16 %v38, %v37
  %vm43 = vcmask 261120
  %v45 = vsel %vm43, %v26, 0
  %47 = vmatprep.subr.bf16.mxu0 0
  %48 = vmatpush1.bf16.msra.mxu0 %v39
  %49 = vmatprep.subr.bf16.mxu0 0
  %50 = vmatpush1.bf16.msra.mxu0 %v40
  %51 = vmatprep.subr.bf16.mxu0 0
  %52 = vmatpush1.bf16.msra.mxu0 0
  %53 = vmatprep.subr.bf16.mxu0 0
  %54 = vmatpush1.bf16.msra.mxu0 0
  %55 = vmatprep.subr.bf16.mxu0 0
  %56 = vmatpush1.bf16.msra.mxu0 0
  %57 = vmatprep.subr.bf16.mxu0 0
  %58 = vmatpush1.bf16.msra.mxu0 0
  %59 = vmatprep.subr.bf16.mxu0 0
  %60 = vmatpush1.bf16.msra.mxu0 0
  %61 = vmatprep.subr.bf16.mxu0 0
  %62 = vmatpush1.bf16.msra.mxu0 0
  %63 = vmatprep.subr.bf16.mxu0 0
  %64 = vmatpush1.bf16.msra.mxu0 0
  %65 = vmatprep.subr.bf16.mxu0 0
  %66 = vmatpush1.bf16.msra.mxu0 0
  %67 = vmatprep.subr.bf16.mxu0 0
  %68 = vmatpush1.bf16.msra.mxu0 0
  %69 = vmatprep.subr.bf16.mxu0 0
  %70 = vmatpush1.bf16.msra.mxu0 0
  %71 = vmatprep.subr.bf16.mxu0 0
  %72 = vmatpush1.bf16.msra.mxu0 0
  %73 = vmatprep.subr.bf16.mxu0 0
  %74 = vmatpush1.bf16.msra.mxu0 0
  %75 = vmatprep.subr.bf16.mxu0 0
  %76 = vmatpush1.bf16.msra.mxu0 0
  %77 = vmatprep.subr.bf16.mxu0 0
  %78 = vmatpush1.bf16.msra.mxu0 0
  %79 = vmatprep.mubr.bf16.mxu0 0
  %80 = vmatmul.mubr.bf16.gmra.mrb[0].mxu0 %v45
  %v81 = vpop.f32.mrb[0].mxu0
  %v82 = vadd.f32 0.0, %v81
  %v83 = vpop.f32.mrb[0].mxu0
  %v84 = vpop.f32.mrb[0].mxu0
  %v85 = vadd.f32 0.0, %v84
  %v86 = vpop.f32.mrb[0].mxu0
  %87 = vdwg.mxu0
  %v88 = vadd.f32 %v22, %v82
  %v89 = vadd.f32 %v23, %v85
  %vm90 = vcmask 785408
  %91 = vst.msk [vmem:[#allocation2] sm:$0xff] %vm90, %v88
  %92 = vst.msk [vmem:[#allocation2 + $0x8] sm:$0xff] %vm90, %v89
  // Predicated region
  $region18: #{custom_model_forward.13} parent=0 // pred_check
    %p93 = pneg %p15
  $region19: #{custom_model_forward.13} parent=0 // pred_check_branch
    %95 = sbr.rel (%p93) target = $region21
  $region20: #{custom_model_forward.13} parent=0 // pred_region
    %v96 = vld [vmem:[#allocation2] sm:$0xff]
    %v97 = vld [vmem:[#allocation2 + $0x8] sm:$0xff]
    %v98 = vld [vmem:[%s2] sm:$0x1]
    %v100 = vlaneseq
    %v101 = vshrl.u32 %v100, 7
    %v102 = vsub.s32 0, %v101
    %v103 = vrot.slane %v98, %v102
    %v105 = vadd.f32 %v96, %v103
    %v106 = vadd.f32 %v97, %v103
    %107 = vst.msk [vmem:[%s3] sm:$0xff] %vm90, %v105
    %108 = vst.msk [vmem:[%s3 + $0x8] sm:$0xff] %vm90, %v106
  $region21: #{custom_model_forward.13} parent=0 // pred_fallthru
    _
  // Predicated region
  $region22: #{custom_model_forward.13} parent=0 // pred_check
    _
  $region23: #{custom_model_forward.13} parent=0 // pred_check_branch
    %110 = sbr.rel (0) target = $region25
  $region24: #{custom_model_forward.13} parent=0 // pred_region
    _
  $region25: #{custom_model_forward.13} parent=0 // pred_fallthru
    _
  // Predicated region
  $region26: #{custom_model_forward.13} parent=0 // pred_check
    _
  $region27: #{custom_model_forward.13} parent=0 // pred_check_branch
    %112 = sbr.rel (0) target = $region29
  $region28: #{custom_model_forward.13} parent=0 // pred_region
    _
  $region29: #{custom_model_forward.13} parent=0 // pred_fallthru
    _

// kernel: custom_model_forward.12
$region0: #{custom_model_forward.12}
  #allocation0 [shape = 'u32[]', space=smem, size = 0x4, offset = 0x4, fixed_abs, tag = 'smem constant byte address 0x4 - core index']
  #allocation1 [shape = 'u32[144,128]{1,0:T(1,128)}', space=vmem, size = 0x12000, scoped, tag = 'internal scratch']
  %s0 = inlined_call_operand.vmem [shape: f32[16,32], index: 0, kind: input, shape index: {}]
  %s1 = inlined_call_operand.vmem [shape: f32[1,32], index: 1, kind: input, shape index: {}]
  %s2 = inlined_call_operand.vmem [shape: f32[1,32], index: 2, kind: input, shape index: {}]
  %s3 = inlined_call_operand.vmem [shape: f32[16,32], index: 3, kind: output, shape index: {}]
  %s4 = sld [smem:[#allocation0]]
  $region22: #{custom_model_forward.12} parent=0
    _
  %s6 = ssub.s32 1, %s4
  %s7 = scalar_select 0, %s6, %s4
  // Predicated region
  $region2: #{custom_model_forward.12} parent=0 // pred_check
    _
  $region3: #{custom_model_forward.12} parent=0 // pred_check_branch
    %9 = sbr.rel (0) target = $region5
  $region4: #{custom_model_forward.12} parent=0 // pred_region
    _
  $region5: #{custom_model_forward.12} parent=0 // pred_fallthru
    _
  // Predicated region
  $region6: #{custom_model_forward.12} parent=0 // pred_check
    _
  $region7: #{custom_model_forward.12} parent=0 // pred_check_branch
    %11 = sbr.rel (0) target = $region9
  $region8: #{custom_model_forward.12} parent=0 // pred_region
    _
  $region9: #{custom_model_forward.12} parent=0 // pred_fallthru
    _
  // Predicated region
  $region10: #{custom_model_forward.12} parent=0 // pred_check
    _
  $region11: #{custom_model_forward.12} parent=0 // pred_check_branch
    %13 = sbr.rel (0) target = $region13
  $region12: #{custom_model_forward.12} parent=0 // pred_region
    _
  $region13: #{custom_model_forward.12} parent=0 // pred_fallthru
    _
  %v14 = vld [vmem:[%s0] sm:$0xff]
  %v15 = vld [vmem:[%s0 + $0x8] sm:$0xff]
  %vm16 = vcmask 261120
  %v17 = vsel %vm16, %v14, 0.0
  %18 = vadd.xlane.f32.xlu0 %v17
  %v19 = vpop.xlane.xlu0 %18
  %v20 = vsel %vm16, %v15, 0.0
  %21 = vadd.xlane.f32.xlu0 %v20
  %v22 = vpop.xlane.xlu0 %21
  %v23 = vrcp.pop 32.0
  %v24 = vmul.f32 %v19, %v23
  %v25 = vmul.f32 %v22, %v23
  %v26 = vsub.f32 %v14, %v24
  %v27 = vsub.f32 %v15, %v25
  %v28 = vmul.f32 %v26, %v26
  %v29 = vmul.f32 %v27, %v27
  %v30 = vsel %vm16, %v28, 0.0
  %31 = vadd.xlane.f32.xlu0 %v30
  %v32 = vpop.xlane.xlu0 %31
  %v33 = vsel %vm16, %v29, 0.0
  %34 = vadd.xlane.f32.xlu0 %v33
  %v35 = vpop.xlane.xlu0 %34
  %v36 = vmul.f32 %v32, %v23
  %v37 = vmul.f32 %v35, %v23
  %v38 = vadd.f32 %v36, 1e-12
  %v39 = vadd.f32 %v37, 1e-12
  %v40 = vrsqrt.pop %v38
  %v41 = vrsqrt.pop %v39
  %v42 = vmul.f32 %v26, %v40
  %v43 = vmul.f32 %v27, %v41
  %v44 = vld [vmem:[%s1] sm:$0x1]
  %v46 = vlaneseq
  %v47 = vshrl.u32 %v46, 7
  %v48 = vsub.s32 0, %v47
  %v49 = vrot.slane %v44, %v48
  %v51 = vmul.f32 %v42, %v49
  %v52 = vmul.f32 %v43, %v49
  %v53 = vld [vmem:[%s2] sm:$0x1]
  %v55 = vlaneseq
  %v56 = vshrl.u32 %v55, 7
  %v57 = vsub.s32 0, %v56
  %v58 = vrot.slane %v53, %v57
  %v60 = vadd.f32 %v51, %v58
  %v61 = vadd.f32 %v52, %v58
  %62 = vst.msk [vmem:[%s3] sm:$0xff] %vm16, %v60
  %63 = vst.msk [vmem:[%s3 + $0x8] sm:$0xff] %vm16, %v61
  // Predicated region
  $region14: #{custom_model_forward.12} parent=0 // pred_check
    _
  $region15: #{custom_model_forward.12} parent=0 // pred_check_branch
    %65 = sbr.rel (0) target = $region17
  $region16: #{custom_model_forward.12} parent=0 // pred_region
    _
  $region17: #{custom_model_forward.12} parent=0 // pred_fallthru
    _
  // Predicated region
  $region18: #{custom_model_forward.12} parent=0 // pred_check
    _
  $region19: #{custom_model_forward.12} parent=0 // pred_check_branch
    %67 = sbr.rel (0) target = $region21
  $region20: #{custom_model_forward.12} parent=0 // pred_region
    _
  $region21: #{custom_model_forward.12} parent=0 // pred_fallthru
    _

// kernel: custom_model_forward.17
$region0: #{custom_model_forward.17}
  #allocation0 [shape = 'u32[]', space=smem, size = 0x4, offset = 0x4, fixed_abs, tag = 'smem constant byte address 0x4 - core index']
  #allocation1 [shape = 'u32[144,128]{1,0:T(1,128)}', space=vmem, size = 0x12000, scoped, tag = 'internal scratch']
  #allocation2 [shape = 'f32[16,32]{1,0:T(8,128)}', space=vmem, size = 0x2000, scoped, tag = 'scratch operand']
  %s0 = inlined_call_operand.vmem [shape: f32[16,64], index: 0, kind: input, shape index: {}]
  %s1 = inlined_call_operand.vmem [shape: bf16[64,32], index: 1, kind: input, shape index: {}]
  %s2 = inlined_call_operand.vmem [shape: f32[1,32], index: 2, kind: input, shape index: {}]
  %s3 = inlined_call_operand.vmem [shape: f32[16,32], index: 3, kind: input, shape index: {}]
  %s4 = inlined_call_operand.vmem [shape: f32[1,32], index: 4, kind: input, shape index: {}]
  %s5 = inlined_call_operand.vmem [shape: f32[1,32], index: 5, kind: input, shape index: {}]
  %s6 = inlined_call_operand.vmem [shape: f32[16,32], index: 6, kind: output, shape index: {}]
  %s7 = sld [smem:[#allocation0]]
  $region42: #{custom_model_forward.17} parent=0
    _
  %s9 = ssub.s32 1, %s7
  %s10 = scalar_select 0, %s9, %s7
  // Predicated region
  $region2: #{custom_model_forward.17} parent=0 // pred_check
    _
  $region3: #{custom_model_forward.17} parent=0 // pred_check_branch
    %12 = sbr.rel (0) target = $region5
  $region4: #{custom_model_forward.17} parent=0 // pred_region
    _
  $region5: #{custom_model_forward.17} parent=0 // pred_fallthru
    _
  // Predicated region
  $region6: #{custom_model_forward.17} parent=0 // pred_check
    _
  $region7: #{custom_model_forward.17} parent=0 // pred_check_branch
    %14 = sbr.rel (0) target = $region9
  $region8: #{custom_model_forward.17} parent=0 // pred_region
    _
  $region9: #{custom_model_forward.17} parent=0 // pred_fallthru
    _
  // Predicated region
  $region10: #{custom_model_forward.17} parent=0 // pred_check
    _
  $region11: #{custom_model_forward.17} parent=0 // pred_check_branch
    %16 = sbr.rel (0) target = $region13
  $region12: #{custom_model_forward.17} parent=0 // pred_region
    _
  $region13: #{custom_model_forward.17} parent=0 // pred_fallthru
    _
  // Predicated region
  $region14: #{custom_model_forward.17} parent=0 // pred_check
    _
  $region15: #{custom_model_forward.17} parent=0 // pred_check_branch
    %18 = sbr.rel (0) target = $region17
  $region16: #{custom_model_forward.17} parent=0 // pred_region
    _
  $region17: #{custom_model_forward.17} parent=0 // pred_fallthru
    _
  // Predicated region
  $region18: #{custom_model_forward.17} parent=0 // pred_check
    _
  $region19: #{custom_model_forward.17} parent=0 // pred_check_branch
    %20 = sbr.rel (0) target = $region21
  $region20: #{custom_model_forward.17} parent=0 // pred_region
    _
  $region21: #{custom_model_forward.17} parent=0 // pred_fallthru
    _
  // Predicated region
  $region22: #{custom_model_forward.17} parent=0 // pred_check
    _
  $region23: #{custom_model_forward.17} parent=0 // pred_check_branch
    %22 = sbr.rel (0) target = $region25
  $region24: #{custom_model_forward.17} parent=0 // pred_region
    _
  $region25: #{custom_model_forward.17} parent=0 // pred_fallthru
    _
  %p24 = scmp.eq.s32.totalorder 0, 0
  // Predicated region
  $region26: #{custom_model_forward.17} parent=0 // pred_check
    %p25 = pneg %p24
  $region27: #{custom_model_forward.17} parent=0 // pred_check_branch
    %27 = sbr.rel (%p25) target = $region29
  $region28: #{custom_model_forward.17} parent=0 // pred_region
    %vm28 = vcmask 261120
    %29 = vst.msk [vmem:[#allocation2] sm:$0xff] %vm28, 0.0
    %30 = vst.msk [vmem:[#allocation2 + $0x8] sm:$0xff] %vm28, 0.0
  $region29: #{custom_model_forward.17} parent=0 // pred_fallthru
    _
  %v31 = vld [vmem:[#allocation2] sm:$0xff]
  %v32 = vld [vmem:[#allocation2 + $0x8] sm:$0xff]
  %v33 = vld [vmem:[%s0] sm:$0xff]
  %v34 = vld [vmem:[%s0 + $0x8] sm:$0xff]
  %v35 = vpack.c.bf16 %v34, %v33
  %v36 = vld [vmem:[%s1] sm:$0xf]
  %v37 = vld [vmem:[%s1 + $0x4] sm:$0xf]
  %v38 = vld [vmem:[%s1 + $0x8] sm:$0xf]
  %v39 = vld [vmem:[%s1 + $0xc] sm:$0xf]
  %v40 = vld [vmem:[%s1 + $0x10] sm:$0xf]
  %v41 = vld [vmem:[%s1 + $0x14] sm:$0xf]
  %v42 = vld [vmem:[%s1 + $0x18] sm:$0xf]
  %v43 = vld [vmem:[%s1 + $0x1c] sm:$0xf]
  %v52 = vunpack.c.l.b16 %v36
  %v53 = vunpack.c.l.b16 %v37
  %v54 = vunpack.c.l.b16 %v38
  %v55 = vunpack.c.l.b16 %v39
  %v56 = vunpack.c.l.b16 %v40
  %v57 = vunpack.c.l.b16 %v41
  %v58 = vunpack.c.l.b16 %v42
  %v59 = vunpack.c.l.b16 %v43
  %v60 = vpack.c.b16 %v53, %v52
  %v61 = vpack.c.b16 %v55, %v54
  %v62 = vpack.c.b16 %v57, %v56
  %v63 = vpack.c.b16 %v59, %v58
  %vm68 = vcmask 523264
  %v70 = vsel %vm68, %v35, 0
  %72 = vmatprep.subr.bf16.mxu0 0
  %73 = vmatpush1.bf16.msra.mxu0 %v60
  %74 = vmatprep.subr.bf16.mxu0 0
  %75 = vmatpush1.bf16.msra.mxu0 %v61
  %76 = vmatprep.subr.bf16.mxu0 0
  %77 = vmatpush1.bf16.msra.mxu0 %v62
  %78 = vmatprep.subr.bf16.mxu0 0
  %79 = vmatpush1.bf16.msra.mxu0 %v63
  %80 = vmatprep.subr.bf16.mxu0 0
  %81 = vmatpush1.bf16.msra.mxu0 0
  %82 = vmatprep.subr.bf16.mxu0 0
  %83 = vmatpush1.bf16.msra.mxu0 0
  %84 = vmatprep.subr.bf16.mxu0 0
  %85 = vmatpush1.bf16.msra.mxu0 0
  %86 = vmatprep.subr.bf16.mxu0 0
  %87 = vmatpush1.bf16.msra.mxu0 0
  %88 = vmatprep.subr.bf16.mxu0 0
  %89 = vmatpush1.bf16.msra.mxu0 0
  %90 = vmatprep.subr.bf16.mxu0 0
  %91 = vmatpush1.bf16.msra.mxu0 0
  %92 = vmatprep.subr.bf16.mxu0 0
  %93 = vmatpush1.bf16.msra.mxu0 0
  %94 = vmatprep.subr.bf16.mxu0 0
  %95 = vmatpush1.bf16.msra.mxu0 0
  %96 = vmatprep.subr.bf16.mxu0 0
  %97 = vmatpush1.bf16.msra.mxu0 0
  %98 = vmatprep.subr.bf16.mxu0 0
  %99 = vmatpush1.bf16.msra.mxu0 0
  %100 = vmatprep.subr.bf16.mxu0 0
  %101 = vmatpush1.bf16.msra.mxu0 0
  %102 = vmatprep.subr.bf16.mxu0 0
  %103 = vmatpush1.bf16.msra.mxu0 0
  %104 = vmatprep.mubr.bf16.mxu0 0
  %105 = vmatmul.mubr.bf16.gmra.mrb[0].mxu0 %v70
  %v106 = vpop.f32.mrb[0].mxu0
  %v107 = vadd.f32 0.0, %v106
  %v108 = vpop.f32.mrb[0].mxu0
  %v109 = vpop.f32.mrb[0].mxu0
  %v110 = vadd.f32 0.0, %v109
  %v111 = vpop.f32.mrb[0].mxu0
  %112 = vdwg.mxu0
  %v113 = vadd.f32 %v31, %v107
  %v114 = vadd.f32 %v32, %v110
  %vm115 = vcmask 261120
  %116 = vst.msk [vmem:[#allocation2] sm:$0xff] %vm115, %v113
  %117 = vst.msk [vmem:[#allocation2 + $0x8] sm:$0xff] %vm115, %v114
  // Predicated region
  $region30: #{custom_model_forward.17} parent=0 // pred_check
    %p118 = pneg %p24
  $region31: #{custom_model_forward.17} parent=0 // pred_check_branch
    %120 = sbr.rel (%p118) target = $region33
  $region32: #{custom_model_forward.17} parent=0 // pred_region
    %v121 = vld [vmem:[#allocation2] sm:$0xff]
    %v122 = vld [vmem:[#allocation2 + $0x8] sm:$0xff]
    %v123 = vld [vmem:[%s2] sm:$0x1]
    %v125 = vlaneseq
    %v126 = vshrl.u32 %v125, 7
    %v127 = vsub.s32 0, %v126
    %v128 = vrot.slane %v123, %v127
    %v130 = vadd.f32 %v121, %v128
    %v131 = vadd.f32 %v122, %v128
    %v132 = vld [vmem:[%s3] sm:$0xff]
    %v133 = vld [vmem:[%s3 + $0x8] sm:$0xff]
    %v134 = vadd.f32 %v130, %v132
    %v135 = vadd.f32 %v131, %v133
    %v136 = vsel %vm115, %v134, 0.0
    %137 = vadd.xlane.f32.xlu0 %v136
    %v138 = vpop.xlane.xlu0 %137
    %v139 = vsel %vm115, %v135, 0.0
    %140 = vadd.xlane.f32.xlu0 %v139
    %v141 = vpop.xlane.xlu0 %140
    %v142 = vrcp.pop 32.0
    %v143 = vmul.f32 %v138, %v142
    %v144 = vmul.f32 %v141, %v142
    %v145 = vsub.f32 %v134, %v143
    %v146 = vsub.f32 %v135, %v144
    %v147 = vmul.f32 %v145, %v145
    %v148 = vmul.f32 %v146, %v146
    %v149 = vsel %vm115, %v147, 0.0
    %150 = vadd.xlane.f32.xlu0 %v149
    %v151 = vpop.xlane.xlu0 %150
    %v152 = vsel %vm115, %v148, 0.0
    %153 = vadd.xlane.f32.xlu0 %v152
    %v154 = vpop.xlane.xlu0 %153
    %v155 = vmul.f32 %v151, %v142
    %v156 = vmul.f32 %v154, %v142
    %v157 = vadd.f32 %v155, 1e-12
    %v158 = vadd.f32 %v156, 1e-12
    %v159 = vrsqrt.pop %v157
    %v160 = vrsqrt.pop %v158
    %v161 = vmul.f32 %v145, %v159
    %v162 = vmul.f32 %v146, %v160
    %v163 = vld [vmem:[%s4] sm:$0x1]
    %v165 = vlaneseq
    %v166 = vshrl.u32 %v165, 7
    %v167 = vsub.s32 0, %v166
    %v168 = vrot.slane %v163, %v167
    %v170 = vmul.f32 %v161, %v168
    %v171 = vmul.f32 %v162, %v168
    %v172 = vld [vmem:[%s5] sm:$0x1]
    %v174 = vlaneseq
    %v175 = vshrl.u32 %v174, 7
    %v176 = vsub.s32 0, %v175
    %v177 = vrot.slane %v172, %v176
    %v179 = vadd.f32 %v170, %v177
    %v180 = vadd.f32 %v171, %v177
    %181 = vst.msk [vmem:[%s6] sm:$0xff] %vm115, %v179
    %182 = vst.msk [vmem:[%s6 + $0x8] sm:$0xff] %vm115, %v180
  $region33: #{custom_model_forward.17} parent=0 // pred_fallthru
    _
  // Predicated region
  $region34: #{custom_model_forward.17} parent=0 // pred_check
    _
  $region35: #{custom_model_forward.17} parent=0 // pred_check_branch
    %184 = sbr.rel (0) target = $region37
  $region36: #{custom_model_forward.17} parent=0 // pred_region
    _
  $region37: #{custom_model_forward.17} parent=0 // pred_fallthru
    _
  // Predicated region
  $region38: #{custom_model_forward.17} parent=0 // pred_check
    _
  $region39: #{custom_model_forward.17} parent=0 // pred_check_branch
    %186 = sbr.rel (0) target = $region41
  $region40: #{custom_model_forward.17} parent=0 // pred_region
    _
  $region41: #{custom_model_forward.17} parent=0 // pred_fallthru
    _

// kernel: custom_model_forward.16
$region0: #{custom_model_forward.16}
  #allocation0 [shape = 'u32[]', space=smem, size = 0x4, offset = 0x4, fixed_abs, tag = 'smem constant byte address 0x4 - core index']
  #allocation1 [shape = 'u32[144,128]{1,0:T(1,128)}', space=vmem, size = 0x12000, scoped, tag = 'internal scratch']
  #allocation2 [shape = 'f32[16,64]{1,0:T(8,128)}', space=vmem, size = 0x2000, scoped, tag = 'scratch operand']
  %s0 = inlined_call_operand.vmem [shape: f32[16,32], index: 0, kind: input, shape index: {}]
  %s1 = inlined_call_operand.vmem [shape: bf16[32,64], index: 1, kind: input, shape index: {}]
  %s2 = inlined_call_operand.vmem [shape: f32[1,64], index: 2, kind: input, shape index: {}]
  %s3 = inlined_call_operand.vmem [shape: f32[16,64], index: 3, kind: output, shape index: {}]
  %s4 = sld [smem:[#allocation0]]
  $region30: #{custom_model_forward.16} parent=0
    _
  %s6 = ssub.s32 1, %s4
  %s7 = scalar_select 0, %s6, %s4
  // Predicated region
  $region2: #{custom_model_forward.16} parent=0 // pred_check
    _
  $region3: #{custom_model_forward.16} parent=0 // pred_check_branch
    %9 = sbr.rel (0) target = $region5
  $region4: #{custom_model_forward.16} parent=0 // pred_region
    _
  $region5: #{custom_model_forward.16} parent=0 // pred_fallthru
    _
  // Predicated region
  $region6: #{custom_model_forward.16} parent=0 // pred_check
    _
  $region7: #{custom_model_forward.16} parent=0 // pred_check_branch
    %11 = sbr.rel (0) target = $region9
  $region8: #{custom_model_forward.16} parent=0 // pred_region
    _
  $region9: #{custom_model_forward.16} parent=0 // pred_fallthru
    _
  // Predicated region
  $region10: #{custom_model_forward.16} parent=0 // pred_check
    _
  $region11: #{custom_model_forward.16} parent=0 // pred_check_branch
    %13 = sbr.rel (0) target = $region13
  $region12: #{custom_model_forward.16} parent=0 // pred_region
    _
  $region13: #{custom_model_forward.16} parent=0 // pred_fallthru
    _
  %p15 = scmp.eq.s32.totalorder 0, 0
  // Predicated region
  $region14: #{custom_model_forward.16} parent=0 // pred_check
    %p16 = pneg %p15
  $region15: #{custom_model_forward.16} parent=0 // pred_check_branch
    %18 = sbr.rel (%p16) target = $region17
  $region16: #{custom_model_forward.16} parent=0 // pred_region
    %vm19 = vcmask 523264
    %20 = vst.msk [vmem:[#allocation2] sm:$0xff] %vm19, 0.0
    %21 = vst.msk [vmem:[#allocation2 + $0x8] sm:$0xff] %vm19, 0.0
  $region17: #{custom_model_forward.16} parent=0 // pred_fallthru
    _
  %v22 = vld [vmem:[#allocation2] sm:$0xff]
  %v23 = vld [vmem:[#allocation2 + $0x8] sm:$0xff]
  %v24 = vld [vmem:[%s0] sm:$0xff]
  %v25 = vld [vmem:[%s0 + $0x8] sm:$0xff]
  %v26 = vpack.c.bf16 %v25, %v24
  %v27 = vld [vmem:[%s1] sm:$0xf]
  %v28 = vld [vmem:[%s1 + $0x4] sm:$0xf]
  %v29 = vld [vmem:[%s1 + $0x8] sm:$0xf]
  %v30 = vld [vmem:[%s1 + $0xc] sm:$0xf]
  %v35 = vunpack.c.l.b16 %v27
  %v36 = vunpack.c.l.b16 %v28
  %v37 = vunpack.c.l.b16 %v29
  %v38 = vunpack.c.l.b16 %v30
  %v39 = vpack.c.b16 %v36, %v35
  %v40 = vpack.c.b16 %v38, %v37
  %vm43 = vcmask 261120
  %v45 = vsel %vm43, %v26, 0
  %47 = vmatprep.subr.bf16.mxu0 0
  %48 = vmatpush1.bf16.msra.mxu0 %v39
  %49 = vmatprep.subr.bf16.mxu0 0
  %50 = vmatpush1.bf16.msra.mxu0 %v40
  %51 = vmatprep.subr.bf16.mxu0 0
  %52 = vmatpush1.bf16.msra.mxu0 0
  %53 = vmatprep.subr.bf16.mxu0 0
  %54 = vmatpush1.bf16.msra.mxu0 0
  %55 = vmatprep.subr.bf16.mxu0 0
  %56 = vmatpush1.bf16.msra.mxu0 0
  %57 = vmatprep.subr.bf16.mxu0 0
  %58 = vmatpush1.bf16.msra.mxu0 0
  %59 = vmatprep.subr.bf16.mxu0 0
  %60 = vmatpush1.bf16.msra.mxu0 0
  %61 = vmatprep.subr.bf16.mxu0 0
  %62 = vmatpush1.bf16.msra.mxu0 0
  %63 = vmatprep.subr.bf16.mxu0 0
  %64 = vmatpush1.bf16.msra.mxu0 0
  %65 = vmatprep.subr.bf16.mxu0 0
  %66 = vmatpush1.bf16.msra.mxu0 0
  %67 = vmatprep.subr.bf16.mxu0 0
  %68 = vmatpush1.bf16.msra.mxu0 0
  %69 = vmatprep.subr.bf16.mxu0 0
  %70 = vmatpush1.bf16.msra.mxu0 0
  %71 = vmatprep.subr.bf16.mxu0 0
  %72 = vmatpush1.bf16.msra.mxu0 0
  %73 = vmatprep.subr.bf16.mxu0 0
  %74 = vmatpush1.bf16.msra.mxu0 0
  %75 = vmatprep.subr.bf16.mxu0 0
  %76 = vmatpush1.bf16.msra.mxu0 0
  %77 = vmatprep.subr.bf16.mxu0 0
  %78 = vmatpush1.bf16.msra.mxu0 0
  %79 = vmatprep.mubr.bf16.mxu0 0
  %80 = vmatmul.mubr.bf16.gmra.mrb[0].mxu0 %v45
  %v81 = vpop.f32.mrb[0].mxu0
  %v82 = vadd.f32 0.0, %v81
  %v83 = vpop.f32.mrb[0].mxu0
  %v84 = vpop.f32.mrb[0].mxu0
  %v85 = vadd.f32 0.0, %v84
  %v86 = vpop.f32.mrb[0].mxu0
  %87 = vdwg.mxu0
  %v88 = vadd.f32 %v22, %v82
  %v89 = vadd.f32 %v23, %v85
  %vm90 = vcmask 523264
  %91 = vst.msk [vmem:[#allocation2] sm:$0xff] %vm90, %v88
  %92 = vst.msk [vmem:[#allocation2 + $0x8] sm:$0xff] %vm90, %v89
  // Predicated region
  $region18: #{custom_model_forward.16} parent=0 // pred_check
    %p93 = pneg %p15
  $region19: #{custom_model_forward.16} parent=0 // pred_check_branch
    %95 = sbr.rel (%p93) target = $region21
  $region20: #{custom_model_forward.16} parent=0 // pred_region
    %v96 = vld [vmem:[#allocation2] sm:$0xff]
    %v97 = vld [vmem:[#allocation2 + $0x8] sm:$0xff]
    %v98 = vld [vmem:[%s2] sm:$0x1]
    %v100 = vlaneseq
    %v101 = vshrl.u32 %v100, 7
    %v102 = vsub.s32 0, %v101
    %v103 = vrot.slane %v98, %v102
    %v105 = vadd.f32 %v96, %v103
    %v106 = vadd.f32 %v97, %v103
    %v107 = vmul.f32 %v105, %v105
    %v108 = vmul.f32 %v106, %v106
    %v109 = vmul.f32 %v105, %v107
    %v110 = vmul.f32 %v106, %v108
    %v111 = vmul.f32 %v109, 0.044715
    %v112 = vmul.f32 %v110, 0.044715
    %v113 = vadd.f32 %v105, %v111
    %v114 = vadd.f32 %v106, %v112
    %v115 = vmul.f32 %v113, 0.7978846
    %v116 = vmul.f32 %v114, 0.7978846
    %v117 = vtanh.pop %v115
    %v118 = vtanh.pop %v116
    %v119 = vadd.f32 %v117, 1.0
    %v120 = vadd.f32 %v118, 1.0
    %v121 = vmul.f32 %v119, 0.5
    %v122 = vmul.f32 %v120, 0.5
    %v123 = vmul.f32 %v105, %v121
    %v124 = vmul.f32 %v106, %v122
    %125 = vst.msk [vmem:[%s3] sm:$0xff] %vm90, %v123
    %126 = vst.msk [vmem:[%s3 + $0x8] sm:$0xff] %vm90, %v124
  $region21: #{custom_model_forward.16} parent=0 // pred_fallthru
    _
  // Predicated region
  $region22: #{custom_model_forward.16} parent=0 // pred_check
    _
  $region23: #{custom_model_forward.16} parent=0 // pred_check_branch
    %128 = sbr.rel (0) target = $region25
  $region24: #{custom_model_forward.16} parent=0 // pred_region
    _
  $region25: #{custom_model_forward.16} parent=0 // pred_fallthru
    _
  // Predicated region
  $region26: #{custom_model_forward.16} parent=0 // pred_check
    _
  $region27: #{custom_model_forward.16} parent=0 // pred_check_branch
    %130 = sbr.rel (0) target = $region29
  $region28: #{custom_model_forward.16} parent=0 // pred_region
    _
  $region29: #{custom_model_forward.16} parent=0 // pred_fallthru
    _

// kernel: custom_model_forward.23
$region0: #{custom_model_forward.23}
  #allocation0 [shape = 'u32[]', space=smem, size = 0x4, offset = 0x4, fixed_abs, tag = 'smem constant byte address 0x4 - core index']
  #allocation1 [shape = 'u32[144,128]{1,0:T(1,128)}', space=vmem, size = 0x12000, scoped, tag = 'internal scratch']
  %s0 = inlined_call_operand.vmem [shape: f32[2,32], index: 0, kind: input, shape index: {}]
  %s1 = inlined_call_operand.vmem [shape: bf16[32,32], index: 1, kind: input, shape index: {}]
  %s2 = inlined_call_operand.vmem [shape: f32[1,32], index: 2, kind: input, shape index: {}]
  %s3 = inlined_call_operand.vmem [shape: bf16[32,128], index: 3, kind: input, shape index: {}]
  %s4 = inlined_call_operand.vmem [shape: f32[1,128], index: 4, kind: input, shape index: {}]
  %s5 = inlined_call_operand.vmem [shape: f32[2,128], index: 5, kind: output, shape index: {}]
  %s6 = sld [smem:[#allocation0]]
  $region30: #{custom_model_forward.23} parent=0
    _
  %s8 = ssub.s32 1, %s6
  %s9 = scalar_select 0, %s8, %s6
  // Predicated region
  $region2: #{custom_model_forward.23} parent=0 // pred_check
    _
  $region3: #{custom_model_forward.23} parent=0 // pred_check_branch
    %11 = sbr.rel (0) target = $region5
  $region4: #{custom_model_forward.23} parent=0 // pred_region
    _
  $region5: #{custom_model_forward.23} parent=0 // pred_fallthru
    _
  // Predicated region
  $region6: #{custom_model_forward.23} parent=0 // pred_check
    _
  $region7: #{custom_model_forward.23} parent=0 // pred_check_branch
    %13 = sbr.rel (0) target = $region9
  $region8: #{custom_model_forward.23} parent=0 // pred_region
    _
  $region9: #{custom_model_forward.23} parent=0 // pred_fallthru
    _
  // Predicated region
  $region10: #{custom_model_forward.23} parent=0 // pred_check
    _
  $region11: #{custom_model_forward.23} parent=0 // pred_check_branch
    %15 = sbr.rel (0) target = $region13
  $region12: #{custom_model_forward.23} parent=0 // pred_region
    _
  $region13: #{custom_model_forward.23} parent=0 // pred_fallthru
    _
  // Predicated region
  $region14: #{custom_model_forward.23} parent=0 // pred_check
    _
  $region15: #{custom_model_forward.23} parent=0 // pred_check_branch
    %17 = sbr.rel (0) target = $region17
  $region16: #{custom_model_forward.23} parent=0 // pred_region
    _
  $region17: #{custom_model_forward.23} parent=0 // pred_fallthru
    _
  // Predicated region
  $region18: #{custom_model_forward.23} parent=0 // pred_check
    _
  $region19: #{custom_model_forward.23} parent=0 // pred_check_branch
    %19 = sbr.rel (0) target = $region21
  $region20: #{custom_model_forward.23} parent=0 // pred_region
    _
  $region21: #{custom_model_forward.23} parent=0 // pred_fallthru
    _
  %v21 = vld [vmem:[%s0] sm:$0x3]
  %v22 = vpack.c.bf16 %v21, %v21
  %v23 = vld [vmem:[%s1] sm:$0xf]
  %v24 = vld [vmem:[%s1 + $0x4] sm:$0xf]
  %v25 = vld [vmem:[%s1 + $0x8] sm:$0xf]
  %v26 = vld [vmem:[%s1 + $0xc] sm:$0xf]
  %v27 = vld [vmem:[%s2] sm:$0x1]
  %v29 = vlaneseq
  %v30 = vshrl.u32 %v29, 7
  %v31 = vsub.s32 0, %v30
  %v32 = vrot.slane %v27, %v31
  %v38 = vunpack.c.l.b16 %v23
  %v39 = vunpack.c.l.b16 %v24
  %v40 = vunpack.c.l.b16 %v25
  %v41 = vunpack.c.l.b16 %v26
  %v42 = vpack.c.b16 %v39, %v38
  %v43 = vpack.c.b16 %v41, %v40
  %vm46 = vcmask 261120
  %v48 = vsel %vm46, %v22, 0
  %50 = vmatprep.subr.bf16.mxu0 0
  %51 = vmatpush1.bf16.msra.mxu0 %v42
  %52 = vmatprep.subr.bf16.mxu0 0
  %53 = vmatpush1.bf16.msra.mxu0 %v43
  %54 = vmatprep.subr.bf16.mxu0 0
  %55 = vmatpush1.bf16.msra.mxu0 0
  %56 = vmatprep.subr.bf16.mxu0 0
  %57 = vmatpush1.bf16.msra.mxu0 0
  %58 = vmatprep.subr.bf16.mxu0 0
  %59 = vmatpush1.bf16.msra.mxu0 0
  %60 = vmatprep.subr.bf16.mxu0 0
  %61 = vmatpush1.bf16.msra.mxu0 0
  %62 = vmatprep.subr.bf16.mxu0 0
  %63 = vmatpush1.bf16.msra.mxu0 0
  %64 = vmatprep.subr.bf16.mxu0 0
  %65 = vmatpush1.bf16.msra.mxu0 0
  %66 = vmatprep.subr.bf16.mxu0 0
  %67 = vmatpush1.bf16.msra.mxu0 0
  %68 = vmatprep.subr.bf16.mxu0 0
  %69 = vmatpush1.bf16.msra.mxu0 0
  %70 = vmatprep.subr.bf16.mxu0 0
  %71 = vmatpush1.bf16.msra.mxu0 0
  %72 = vmatprep.subr.bf16.mxu0 0
  %73 = vmatpush1.bf16.msra.mxu0 0
  %74 = vmatprep.subr.bf16.mxu0 0
  %75 = vmatpush1.bf16.msra.mxu0 0
  %76 = vmatprep.subr.bf16.mxu0 0
  %77 = vmatpush1.bf16.msra.mxu0 0
  %78 = vmatprep.subr.bf16.mxu0 0
  %79 = vmatpush1.bf16.msra.mxu0 0
  %80 = vmatprep.subr.bf16.mxu0 0
  %81 = vmatpush1.bf16.msra.mxu0 0
  %82 = vmatprep.mubr.bf16.mxu0 0
  %83 = vmatmul.mubr.bf16.gmra.mrb[0].mxu0 %v48
  %v84 = vpop.f32.mrb[0].mxu0
  %v85 = vadd.f32 %v32, %v84
  %v86 = vpop.f32.mrb[0].mxu0
  %v87 = vpop.f32.mrb[0].mxu0
  %v88 = vpop.f32.mrb[0].mxu0
  %89 = vdwg.mxu0
  %v90 = vtanh.pop %v85
  %v91 = vpack.c.bf16 %v90, %v90
  %v92 = vld [vmem:[%s3] sm:$0xf]
  %v93 = vld [vmem:[%s3 + $0x4] sm:$0xf]
  %v94 = vld [vmem:[%s3 + $0x8] sm:$0xf]
  %v95 = vld [vmem:[%s3 + $0xc] sm:$0xf]
  %v96 = vld [vmem:[%s4] sm:$0x1]
  %v98 = vlaneseq
  %v99 = vshrl.u32 %v98, 7
  %v100 = vsub.s32 0, %v99
  %v101 = vrot.slane %v96, %v100
  %v107 = vunpack.c.l.b16 %v92
  %v108 = vunpack.c.l.b16 %v93
  %v109 = vunpack.c.l.b16 %v94
  %v110 = vunpack.c.l.b16 %v95
  %v111 = vpack.c.b16 %v108, %v107
  %v112 = vpack.c.b16 %v110, %v109
  %v116 = vsel %vm46, %v91, 0
  %118 = vmatprep.subr.bf16.mxu0 0
  %119 = vmatpush1.bf16.msra.mxu0 %v111
  %120 = vmatprep.subr.bf16.mxu0 0
  %121 = vmatpush1.bf16.msra.mxu0 %v112
  %122 = vmatprep.subr.bf16.mxu0 0
  %123 = vmatpush1.bf16.msra.mxu0 0
  %124 = vmatprep.subr.bf16.mxu0 0
  %125 = vmatpush1.bf16.msra.mxu0 0
  %126 = vmatprep.subr.bf16.mxu0 0
  %127 = vmatpush1.bf16.msra.mxu0 0
  %128 = vmatprep.subr.bf16.mxu0 0
  %129 = vmatpush1.bf16.msra.mxu0 0
  %130 = vmatprep.subr.bf16.mxu0 0
  %131 = vmatpush1.bf16.msra.mxu0 0
  %132 = vmatprep.subr.bf16.mxu0 0
  %133 = vmatpush1.bf16.msra.mxu0 0
  %134 = vmatprep.subr.bf16.mxu0 0
  %135 = vmatpush1.bf16.msra.mxu0 0
  %136 = vmatprep.subr.bf16.mxu0 0
  %137 = vmatpush1.bf16.msra.mxu0 0
  %138 = vmatprep.subr.bf16.mxu0 0
  %139 = vmatpush1.bf16.msra.mxu0 0
  %140 = vmatprep.subr.bf16.mxu0 0
  %141 = vmatpush1.bf16.msra.mxu0 0
  %142 = vmatprep.subr.bf16.mxu0 0
  %143 = vmatpush1.bf16.msra.mxu0 0
  %144 = vmatprep.subr.bf16.mxu0 0
  %145 = vmatpush1.bf16.msra.mxu0 0
  %146 = vmatprep.subr.bf16.mxu0 0
  %147 = vmatpush1.bf16.msra.mxu0 0
  %148 = vmatprep.subr.bf16.mxu0 0
  %149 = vmatpush1.bf16.msra.mxu0 0
  %150 = vmatprep.mubr.bf16.mxu0 0
  %151 = vmatmul.mubr.bf16.gmra.mrb[0].mxu0 %v116
  %v152 = vpop.f32.mrb[0].mxu0
  %v153 = vadd.f32 %v101, %v152
  %v154 = vpop.f32.mrb[0].mxu0
  %v155 = vpop.f32.mrb[0].mxu0
  %v156 = vpop.f32.mrb[0].mxu0
  %157 = vdwg.mxu0
  %158 = vst [vmem:[%s5] sm:$0x3] %v153
  // Predicated region
  $region22: #{custom_model_forward.23} parent=0 // pred_check
    _
  $region23: #{custom_model_forward.23} parent=0 // pred_check_branch
    %160 = sbr.rel (0) target = $region25
  $region24: #{custom_model_forward.23} parent=0 // pred_region
    _
  $region25: #{custom_model_forward.23} parent=0 // pred_fallthru
    _
  // Predicated region
  $region26: #{custom_model_forward.23} parent=0 // pred_check
    _
  $region27: #{custom_model_forward.23} parent=0 // pred_check_branch
    %162 = sbr.rel (0) target = $region29
  $region28: #{custom_model_forward.23} parent=0 // pred_region
    _
  $region29: #{custom_model_forward.23} parent=0 // pred_fallthru
    _

</llo_original>
